<compile_context>
chip_gen: v5e
topology: v5e:2x2
jax: 0.10.0
libtpu: 0.0.40
codegen_flags: <defaults>
</compile_context>

<pallas_src>
import math

import jax
import jax.numpy as jnp
from jax.experimental import pallas as pl
from jax.experimental.pallas import tpu as pltpu


def _round_up(x, m):
    return (x + m - 1) // m * m


def _bclassifier_kernel(n_ref,                                    # scalar prefetch: [actual N]
                        feats_ref, mfeats_ref, gamma_ref, beta_ref,
                        wq_ref, bq_ref, wv_ref, bv_ref,
                        wfcc_ref, bfcc_ref,
                        out_ref,
                        qmax_sc, m_sc, l_sc, acc_sc):
    step = pl.program_id(0)
    n_steps = pl.num_programs(0)
    tile_n, d = feats_ref.shape
    oc = mfeats_ref.shape[0]

    gamma = gamma_ref[...]
    beta = beta_ref[...]

    def layer_norm(x):
        # LayerNorm(D), elementwise affine, eps=1e-5 (all-zero padded rows -> beta, no NaN)
        mean = jnp.mean(x, axis=-1, keepdims=True)
        xc = x - mean
        var = jnp.mean(xc * xc, axis=-1, keepdims=True)
        return xc * jax.lax.rsqrt(var + 1e-5) * gamma + beta

    # ---- step 0: init online-softmax state; build q_max from the per-class
    #      top instances (gathered in the wrapper, re-normalized here). --------
    @pl.when(step == 0)
    def _init():
        m_sc[...] = jnp.full_like(m_sc, -jnp.inf)
        l_sc[...] = jnp.zeros_like(l_sc)
        acc_sc[...] = jnp.zeros_like(acc_sc)
        m_norm = layer_norm(mfeats_ref[...])                       # (OC, D) f32
        qmax_sc[...] = (
            jnp.dot(m_norm.astype(jnp.bfloat16), wq_ref[...],
                    preferred_element_type=jnp.float32) + bq_ref[...])   # (OC, 128)

    # ---- streamed tile: LayerNorm -> V and Q projections (bf16 MXU, f32 acc) --
    feats_n = layer_norm(feats_ref[...])                           # (TILE_N, D) f32
    feats_b = feats_n.astype(jnp.bfloat16)
    v_tile = (jnp.dot(feats_b, wv_ref[...],
                      preferred_element_type=jnp.float32) + bv_ref[...])   # (TILE_N, D)
    q_tile = (jnp.dot(feats_b, wq_ref[...],
                      preferred_element_type=jnp.float32) + bq_ref[...])   # (TILE_N, 128)

    # ---- transposed attention scores: (OC, TILE_N), N is the lane axis -------
    scale = 1.0 / math.sqrt(float(q_tile.shape[-1]))
    s = jax.lax.dot_general(
        qmax_sc[...].astype(jnp.bfloat16), q_tile.astype(jnp.bfloat16),
        (((1,), (1,)), ((), ())),
        preferred_element_type=jnp.float32) * scale                # (OC, TILE_N)

    # Mask padded tail instances (only present in the last tile).  Padded
    # columns may enter the running max (harmless) but never the sum / acc.
    col = jax.lax.broadcasted_iota(jnp.int32, s.shape, 1) + step * tile_n
    valid = (col < n_ref[0]).astype(jnp.float32)                   # (OC, TILE_N)

    # ---- online softmax over the instance axis --------------------------------
    m_prev = m_sc[...]                                             # (OC, 1)
    m_new = jnp.maximum(m_prev, jnp.max(s, axis=-1, keepdims=True))
    alpha = jnp.exp(m_prev - m_new)                                # (OC, 1)
    p = jnp.exp(s - m_new) * valid                                 # (OC, TILE_N)
    l_sc[...] = alpha * l_sc[...] + jnp.sum(p, axis=-1, keepdims=True)
    acc_sc[...] = alpha * acc_sc[...] + jnp.dot(
        p.astype(jnp.bfloat16), v_tile.astype(jnp.bfloat16),
        preferred_element_type=jnp.float32)                        # (OC, D)
    m_sc[...] = m_new

    # ---- epilogue: normalize B, then Conv1d(OC, OC, kernel_size=D) -----------
    @pl.when(step == n_steps - 1)
    def _fin():
        b_mat = acc_sc[...] * pl.reciprocal(l_sc[...], approx=True)    # (OC, D)
        cc = bfcc_ref[...]                                             # (1, OC)
        # The conv collapses (in_channel, position) entirely.  OC is tiny and
        # this runs once per bag, so we keep OC statically-sliced (D, OC)
        # matmuls against the pre-flattened (OC*D, OC) weight instead of an
        # in-kernel (OC, D) -> (1, OC*D) relayout + single matmul.
        for i in range(oc):
            cc = cc + jnp.dot(b_mat[i:i + 1, :],
                              wfcc_ref[i * d:(i + 1) * d, :],
                              preferred_element_type=jnp.float32)      # (1, OC)
        out_ref[...] = cc


def bclassifier_forward(feats, c, params, tile_n=512):
    """feats: (N, D) f32, c: (N, OC) f32 -> (1, OC) f32."""
    n, d = feats.shape
    oc = c.shape[1]

    # Per-class top instance (argmax over instances) computed once up front;
    # only the OC selected raw rows are fed to the kernel.
    idx = jnp.argmax(c, axis=0)                      # == m_indices[0, :]
    m_feats = jnp.take(feats, idx, axis=0)           # (OC, D), pre-norm rows

    # Tile size: multiple of 128 (MXU-friendly).  Default 512 keeps the
    # double-buffered f32 feats tile + bf16 weights well inside v7x's 64 MiB
    # VMEM for D up to ~2048; raise on v5e/v6e (128 MiB) for large D if desired.
    tile_n = max(128, (min(tile_n, _round_up(n, 128)) // 128) * 128)
    padded_n = _round_up(n, tile_n)
    if padded_n != n:
        feats = jnp.pad(feats, ((0, padded_n - n), (0, 0)))
    n_actual = jnp.array([n], dtype=jnp.int32)

    # bf16 matmul operands (f32 accumulation inside the kernel).
    wq = params["wq"].astype(jnp.bfloat16)
    wv = params["wv"].astype(jnp.bfloat16)

    grid_spec = pltpu.PrefetchScalarGridSpec(
        num_scalar_prefetch=1,
        grid=(padded_n // tile_n,),
        in_specs=[
            pl.BlockSpec((tile_n, d), lambda i, _n: (i, 0)),      # feats (streamed)
            pl.BlockSpec((oc, d), lambda i, _n: (0, 0)),          # m_feats (resident)
            pl.BlockSpec((1, d), lambda i, _n: (0, 0)),           # gamma
            pl.BlockSpec((1, d), lambda i, _n: (0, 0)),           # beta
            pl.BlockSpec((d, 128), lambda i, _n: (0, 0)),         # wq (bf16)
            pl.BlockSpec((1, 128), lambda i, _n: (0, 0)),         # bq
            pl.BlockSpec((d, d), lambda i, _n: (0, 0)),           # wv (bf16)
            pl.BlockSpec((1, d), lambda i, _n: (0, 0)),           # bv
            pl.BlockSpec((oc * d, oc), lambda i, _n: (0, 0)),     # conv weight (flattened)
            pl.BlockSpec((1, oc), lambda i, _n: (0, 0)),          # conv bias
        ],
        out_specs=pl.BlockSpec((1, oc), lambda i, _n: (0, 0)),
        scratch_shapes=[
            pltpu.VMEM((oc, 128), jnp.float32),   # q_max
            pltpu.VMEM((oc, 1), jnp.float32),     # running max
            pltpu.VMEM((oc, 1), jnp.float32),     # running sum
            pltpu.VMEM((oc, d), jnp.float32),     # unnormalized A^T @ V
        ],
    )

    kernel = pl.pallas_call(
        _bclassifier_kernel,
        out_shape=jax.ShapeDtypeStruct((1, oc), jnp.float32),
        grid_spec=grid_spec,
        compiler_params=pltpu.CompilerParams(
            dimension_semantics=("arbitrary",),       # N is a reduction axis
            vmem_limit_bytes=64 * 1024 * 1024,
        ),
    )
    return kernel(n_actual, feats, m_feats,
                  params["gamma"], params["beta"],
                  wq, params["bq"], wv, params["bv"],
                  params["wfcc_2d"], params["bfcc"])


def init_params(key, input_size, output_class):
    """Deterministic PyTorch-default-style (uniform +-1/sqrt(fan_in)) init."""
    ks = jax.random.split(key, 6)

    def unif(k, shape, fan_in):
        bound = 1.0 / math.sqrt(fan_in)
        return jax.random.uniform(k, shape, jnp.float32, -bound, bound)

    wq = unif(ks[0], (input_size, 128), input_size)
    bq = unif(ks[1], (1, 128), input_size)
    wv = unif(ks[2], (input_size, input_size), input_size)
    bv = unif(ks[3], (1, input_size), input_size)
    gamma = jnp.ones((1, input_size), jnp.float32)
    beta = jnp.zeros((1, input_size), jnp.float32)
    # Conv1d weight in PyTorch layout (out_ch, in_ch, kernel=D)
    fan_fcc = output_class * input_size
    w_conv = unif(ks[4], (output_class, output_class, input_size), fan_fcc)
    bfcc = unif(ks[5], (1, output_class), fan_fcc)
    # flatten for the kernel epilogue: wfcc_2d[i*D + k, o] = w_conv[o, i, k]
    wfcc_2d = jnp.transpose(w_conv, (1, 2, 0)).reshape(output_class * input_size,
                                                       output_class)
    return dict(wq=wq, bq=bq, wv=wv, bv=bv, gamma=gamma, beta=beta,
                w_conv=w_conv, wfcc_2d=wfcc_2d, bfcc=bfcc)


def reference_forward(feats, c, params):
    """Plain-JAX f32 reference mirroring the PyTorch forward."""
    mean = jnp.mean(feats, axis=-1, keepdims=True)
    var = jnp.mean((feats - mean) ** 2, axis=-1, keepdims=True)
    f = (feats - mean) / jnp.sqrt(var + 1e-5) * params["gamma"] + params["beta"]
    V = f @ params["wv"] + params["bv"]
    Q = f @ params["wq"] + params["bq"]
    idx = jnp.argmax(c, axis=0)                  # m_indices[0, :]
    m_feats = f[idx]
    q_max = m_feats @ params["wq"] + params["bq"]
    A = Q @ q_max.T / jnp.sqrt(jnp.float32(Q.shape[1]))
    A = jax.nn.softmax(A, axis=0)
    B = A.T @ V                                  # (OC, D)
    C = jnp.einsum("ik,oik->o", B, params["w_conv"])[None, :] + params["bfcc"]
    return C


if __name__ == "__main__":
    # Small but non-trivial: N not a multiple of the tile (exercises masking),
    # two grid steps (exercises the online-softmax accumulation).
    N, D, OC = 200, 128, 4
    key = jax.random.PRNGKey(0)
    k_feats, k_c, k_params = jax.random.split(key, 3)
    feats = jax.random.normal(k_feats, (N, D), jnp.float32)
    c = jax.random.normal(k_c, (N, OC), jnp.float32)
    params = init_params(k_params, D, OC)

    out = bclassifier_forward(feats, c, params, tile_n=128)
    out = jax.block_until_ready(out)

    ref = reference_forward(feats, c, params)
    assert out.shape == (1, OC), out.shape
    assert bool(jnp.all(jnp.isfinite(out)))
    # bf16 matmul operands in the kernel vs pure-f32 reference -> modest tolerance.
    assert bool(jnp.allclose(out, ref, atol=2e-2, rtol=2e-2)), (out, ref)
    print("KERNEL_OK")
</pallas_src>

<mosaic_0001>
module attributes {stable_mosaic.version = 11 : i64} {
  func.func @_bclassifier_kernel(%arg0: i32, %arg1: memref<1xi32, #tpu.memory_space<smem>>, %arg2: memref<128x128xf32, #tpu.memory_space<vmem>>, %arg3: memref<4x128xf32, #tpu.memory_space<vmem>>, %arg4: memref<1x128xf32, #tpu.memory_space<vmem>>, %arg5: memref<1x128xf32, #tpu.memory_space<vmem>>, %arg6: memref<128x128xbf16, #tpu.memory_space<vmem>>, %arg7: memref<1x128xf32, #tpu.memory_space<vmem>>, %arg8: memref<128x128xbf16, #tpu.memory_space<vmem>>, %arg9: memref<1x128xf32, #tpu.memory_space<vmem>>, %arg10: memref<512x4xf32, #tpu.memory_space<vmem>>, %arg11: memref<1x4xf32, #tpu.memory_space<vmem>>, %arg12: memref<1x4xf32, #tpu.memory_space<vmem>>, %arg13: memref<4x128xf32, #tpu.memory_space<vmem>>, %arg14: memref<4x1xf32, #tpu.memory_space<vmem>>, %arg15: memref<4x1xf32, #tpu.memory_space<vmem>>, %arg16: memref<4x128xf32, #tpu.memory_space<vmem>>) attributes {dimension_semantics = [#tpu.dimension_semantics<arbitrary>], iteration_bounds = array<i64: 2>, scalar_prefetch = 1 : i64, scratch_operands = 4 : i64, tpu.core_type = #tpu.core_type<tc>, window_params = [{transform_indices = @transform_0, window_bounds = array<i64: 128, 128>}, {pipeline_mode = #tpu.pipeline_mode<synchronous>, transform_indices = @transform_1, window_bounds = array<i64: 4, 128>}, {pipeline_mode = #tpu.pipeline_mode<synchronous>, transform_indices = @transform_2, window_bounds = array<i64: 1, 128>}, {pipeline_mode = #tpu.pipeline_mode<synchronous>, transform_indices = @transform_3, window_bounds = array<i64: 1, 128>}, {pipeline_mode = #tpu.pipeline_mode<synchronous>, transform_indices = @transform_4, window_bounds = array<i64: 128, 128>}, {pipeline_mode = #tpu.pipeline_mode<synchronous>, transform_indices = @transform_5, window_bounds = array<i64: 1, 128>}, {pipeline_mode = #tpu.pipeline_mode<synchronous>, transform_indices = @transform_6, window_bounds = array<i64: 128, 128>}, {pipeline_mode = #tpu.pipeline_mode<synchronous>, transform_indices = @transform_7, window_bounds = array<i64: 1, 128>}, {pipeline_mode = #tpu.pipeline_mode<synchronous>, transform_indices = @transform_8, window_bounds = array<i64: 512, 4>}, {pipeline_mode = #tpu.pipeline_mode<synchronous>, transform_indices = @transform_9, window_bounds = array<i64: 1, 4>}, {pipeline_mode = #tpu.pipeline_mode<synchronous>, transform_indices = @transform_10, window_bounds = array<i64: 1, 4>}]} {
    %c0 = arith.constant 0 : index
    %c0_0 = arith.constant 0 : index
    %0 = vector.load %arg4[%c0, %c0_0] : memref<1x128xf32, #tpu.memory_space<vmem>>, vector<1x128xf32>
    %c0_1 = arith.constant 0 : index
    %c0_2 = arith.constant 0 : index
    %1 = vector.load %arg5[%c0_1, %c0_2] : memref<1x128xf32, #tpu.memory_space<vmem>>, vector<1x128xf32>
    %c0_i32 = arith.constant 0 : i32
    %2 = arith.cmpi eq, %arg0, %c0_i32 : i32
    %3 = arith.extui %2 : i1 to i32
    %c0_i32_3 = arith.constant 0 : i32
    %4 = arith.cmpi ne, %3, %c0_i32_3 : i32
    scf.if %4 {
      %cst_41 = arith.constant 0xFF800000 : f32
      %80 = vector.broadcast %cst_41 : f32 to vector<4x1xf32>
      %c0_42 = arith.constant 0 : index
      %c0_43 = arith.constant 0 : index
      %81 = vector.load %arg14[%c0_42, %c0_43] : memref<4x1xf32, #tpu.memory_space<vmem>>, vector<4x1xf32>
      tpu.vector_store %arg14[%c0_42, %c0_43], %80 {strides = array<i32>} : memref<4x1xf32, #tpu.memory_space<vmem>>, vector<4x1xf32>,
      %cst_44 = arith.constant 0.000000e+00 : f32
      %82 = vector.broadcast %cst_44 : f32 to vector<4x1xf32>
      %c0_45 = arith.constant 0 : index
      %c0_46 = arith.constant 0 : index
      %83 = vector.load %arg15[%c0_45, %c0_46] : memref<4x1xf32, #tpu.memory_space<vmem>>, vector<4x1xf32>
      tpu.vector_store %arg15[%c0_45, %c0_46], %82 {strides = array<i32>} : memref<4x1xf32, #tpu.memory_space<vmem>>, vector<4x1xf32>,
      %cst_47 = arith.constant 0.000000e+00 : f32
      %84 = vector.broadcast %cst_47 : f32 to vector<4x128xf32>
      %c0_48 = arith.constant 0 : index
      %c0_49 = arith.constant 0 : index
      %85 = vector.load %arg16[%c0_48, %c0_49] : memref<4x128xf32, #tpu.memory_space<vmem>>, vector<4x128xf32>
      tpu.vector_store %arg16[%c0_48, %c0_49], %84 {strides = array<i32>} : memref<4x128xf32, #tpu.memory_space<vmem>>, vector<4x128xf32>,
      %c0_50 = arith.constant 0 : index
      %c0_51 = arith.constant 0 : index
      %86 = vector.load %arg3[%c0_50, %c0_51] : memref<4x128xf32, #tpu.memory_space<vmem>>, vector<4x128xf32>
      %cst_52 = arith.constant dense<0.000000e+00> : vector<4xf32>
      %87 = vector.multi_reduction <add>, %86, %cst_52 [1] : vector<4x128xf32> to vector<4xf32>
      %88 = vector.shape_cast %87 : vector<4xf32> to vector<4x1xf32>
      %cst_53 = arith.constant 1.280000e+02 : f32
      %89 = vector.broadcast %cst_53 : f32 to vector<4x1xf32>
      %90 = arith.divf %88, %89 : vector<4x1xf32>
      %91 = vector.broadcast %90 : vector<4x1xf32> to vector<4x128xf32>
      %92 = arith.subf %86, %91 : vector<4x128xf32>
      %93 = arith.mulf %92, %92 : vector<4x128xf32>
      %cst_54 = arith.constant dense<0.000000e+00> : vector<4xf32>
      %94 = vector.multi_reduction <add>, %93, %cst_54 [1] : vector<4x128xf32> to vector<4xf32>
      %95 = vector.shape_cast %94 : vector<4xf32> to vector<4x1xf32>
      %cst_55 = arith.constant 1.280000e+02 : f32
      %96 = vector.broadcast %cst_55 : f32 to vector<4x1xf32>
      %97 = arith.divf %95, %96 : vector<4x1xf32>
      %cst_56 = arith.constant 9.99999974E-6 : f32
      %98 = vector.broadcast %cst_56 : f32 to vector<4x1xf32>
      %99 = arith.addf %97, %98 : vector<4x1xf32>
      %100 = math.rsqrt %99 : vector<4x1xf32>
      %101 = vector.broadcast %100 : vector<4x1xf32> to vector<4x128xf32>
      %102 = arith.mulf %92, %101 : vector<4x128xf32>
      %103 = vector.broadcast %0 : vector<1x128xf32> to vector<4x128xf32>
      %104 = arith.mulf %102, %103 : vector<4x128xf32>
      %105 = vector.broadcast %1 : vector<1x128xf32> to vector<4x128xf32>
      %106 = arith.addf %104, %105 : vector<4x128xf32>
      %107 = arith.truncf %106 : vector<4x128xf32> to vector<4x128xbf16>
      %c0_57 = arith.constant 0 : index
      %c0_58 = arith.constant 0 : index
      %108 = vector.load %arg6[%c0_57, %c0_58] : memref<128x128xbf16, #tpu.memory_space<vmem>>, vector<128x128xbf16>
      %cst_59 = arith.constant dense<0.000000e+00> : vector<4x128xf32>
      %109 = tpu.matmul %107, %108, %cst_59 {dimension_numbers = #tpu.dot_dimension_numbers<[1], [0], [0], [1], [0, 0, 1, 1], [], []>} : vector<4x128xbf16>, vector<128x128xbf16>, vector<4x128xf32> -> vector<4x128xf32>
      %c0_60 = arith.constant 0 : index
      %c0_61 = arith.constant 0 : index
      %110 = vector.load %arg7[%c0_60, %c0_61] : memref<1x128xf32, #tpu.memory_space<vmem>>, vector<1x128xf32>
      %111 = vector.broadcast %110 : vector<1x128xf32> to vector<4x128xf32>
      %112 = arith.addf %109, %111 : vector<4x128xf32>
      %c0_62 = arith.constant 0 : index
      %c0_63 = arith.constant 0 : index
      %113 = vector.load %arg13[%c0_62, %c0_63] : memref<4x128xf32, #tpu.memory_space<vmem>>, vector<4x128xf32>
      tpu.vector_store %arg13[%c0_62, %c0_63], %112 {strides = array<i32>} : memref<4x128xf32, #tpu.memory_space<vmem>>, vector<4x128xf32>,
    } else {
    }
    %c0_4 = arith.constant 0 : index
    %c0_5 = arith.constant 0 : index
    %5 = vector.load %arg2[%c0_4, %c0_5] : memref<128x128xf32, #tpu.memory_space<vmem>>, vector<128x128xf32>
    %cst = arith.constant dense<0.000000e+00> : vector<128xf32>
    %6 = vector.multi_reduction <add>, %5, %cst [1] : vector<128x128xf32> to vector<128xf32>
    %7 = vector.shape_cast %6 : vector<128xf32> to vector<128x1xf32>
    %cst_6 = arith.constant 1.280000e+02 : f32
    %8 = vector.broadcast %cst_6 : f32 to vector<128x1xf32>
    %9 = arith.divf %7, %8 : vector<128x1xf32>
    %10 = vector.broadcast %9 : vector<128x1xf32> to vector<128x128xf32>
    %11 = arith.subf %5, %10 : vector<128x128xf32>
    %12 = arith.mulf %11, %11 : vector<128x128xf32>
    %cst_7 = arith.constant dense<0.000000e+00> : vector<128xf32>
    %13 = vector.multi_reduction <add>, %12, %cst_7 [1] : vector<128x128xf32> to vector<128xf32>
    %14 = vector.shape_cast %13 : vector<128xf32> to vector<128x1xf32>
    %cst_8 = arith.constant 1.280000e+02 : f32
    %15 = vector.broadcast %cst_8 : f32 to vector<128x1xf32>
    %16 = arith.divf %14, %15 : vector<128x1xf32>
    %cst_9 = arith.constant 9.99999974E-6 : f32
    %17 = vector.broadcast %cst_9 : f32 to vector<128x1xf32>
    %18 = arith.addf %16, %17 : vector<128x1xf32>
    %19 = math.rsqrt %18 : vector<128x1xf32>
    %20 = vector.broadcast %19 : vector<128x1xf32> to vector<128x128xf32>
    %21 = arith.mulf %11, %20 : vector<128x128xf32>
    %22 = vector.broadcast %0 : vector<1x128xf32> to vector<128x128xf32>
    %23 = arith.mulf %21, %22 : vector<128x128xf32>
    %24 = vector.broadcast %1 : vector<1x128xf32> to vector<128x128xf32>
    %25 = arith.addf %23, %24 : vector<128x128xf32>
    %26 = arith.truncf %25 : vector<128x128xf32> to vector<128x128xbf16>
    %c0_10 = arith.constant 0 : index
    %c0_11 = arith.constant 0 : index
    %27 = vector.load %arg8[%c0_10, %c0_11] : memref<128x128xbf16, #tpu.memory_space<vmem>>, vector<128x128xbf16>
    %cst_12 = arith.constant dense<0.000000e+00> : vector<128x128xf32>
    %28 = tpu.matmul %26, %27, %cst_12 {dimension_numbers = #tpu.dot_dimension_numbers<[1], [0], [0], [1], [0, 0, 1, 1], [], []>} : vector<128x128xbf16>, vector<128x128xbf16>, vector<128x128xf32> -> vector<128x128xf32>
    %c0_13 = arith.constant 0 : index
    %c0_14 = arith.constant 0 : index
    %29 = vector.load %arg9[%c0_13, %c0_14] : memref<1x128xf32, #tpu.memory_space<vmem>>, vector<1x128xf32>
    %30 = vector.broadcast %29 : vector<1x128xf32> to vector<128x128xf32>
    %31 = arith.addf %28, %30 : vector<128x128xf32>
    %c0_15 = arith.constant 0 : index
    %c0_16 = arith.constant 0 : index
    %32 = vector.load %arg6[%c0_15, %c0_16] : memref<128x128xbf16, #tpu.memory_space<vmem>>, vector<128x128xbf16>
    %cst_17 = arith.constant dense<0.000000e+00> : vector<128x128xf32>
    %33 = tpu.matmul %26, %32, %cst_17 {dimension_numbers = #tpu.dot_dimension_numbers<[1], [0], [0], [1], [0, 0, 1, 1], [], []>} : vector<128x128xbf16>, vector<128x128xbf16>, vector<128x128xf32> -> vector<128x128xf32>
    %c0_18 = arith.constant 0 : index
    %c0_19 = arith.constant 0 : index
    %34 = vector.load %arg7[%c0_18, %c0_19] : memref<1x128xf32, #tpu.memory_space<vmem>>, vector<1x128xf32>
    %35 = vector.broadcast %34 : vector<1x128xf32> to vector<128x128xf32>
    %36 = arith.addf %33, %35 : vector<128x128xf32>
    %c0_20 = arith.constant 0 : index
    %c0_21 = arith.constant 0 : index
    %37 = vector.load %arg13[%c0_20, %c0_21] : memref<4x128xf32, #tpu.memory_space<vmem>>, vector<4x128xf32>
    %38 = arith.truncf %37 : vector<4x128xf32> to vector<4x128xbf16>
    %39 = arith.truncf %36 : vector<128x128xf32> to vector<128x128xbf16>
    %cst_22 = arith.constant dense<0.000000e+00> : vector<4x128xf32>
    %40 = tpu.matmul %38, %39, %cst_22 {dimension_numbers = #tpu.dot_dimension_numbers<[1], [1], [0], [0], [0, 0, 1, 0], [], []>} : vector<4x128xbf16>, vector<128x128xbf16>, vector<4x128xf32> -> vector<4x128xf32>
    %cst_23 = arith.constant 0.0883883461 : f32
    %41 = vector.broadcast %cst_23 : f32 to vector<4x128xf32>
    %42 = arith.mulf %40, %41 : vector<4x128xf32>
    %43 = tpu.iota {dimensions = array<i32: 1>} : vector<4x128xi32>
    %c128_i32 = arith.constant 128 : i32
    %44 = arith.muli %arg0, %c128_i32 : i32
    %45 = vector.broadcast %44 : i32 to vector<4x128xi32>
    %46 = arith.addi %43, %45 : vector<4x128xi32>
    %c0_24 = arith.constant 0 : index
    %47 = memref.load %arg1[%c0_24] : memref<1xi32, #tpu.memory_space<smem>>
    %48 = vector.broadcast %47 : i32 to vector<4x128xi32>
    %49 = arith.cmpi slt, %46, %48 : vector<4x128xi32>
    %50 = arith.extui %49 : vector<4x128xi1> to vector<4x128xi32>
    %51 = arith.sitofp %50 : vector<4x128xi32> to vector<4x128xf32>
    %c0_25 = arith.constant 0 : index
    %c0_26 = arith.constant 0 : index
    %52 = vector.load %arg14[%c0_25, %c0_26] : memref<4x1xf32, #tpu.memory_space<vmem>>, vector<4x1xf32>
    %cst_27 = arith.constant dense<0xFF800000> : vector<4xf32>
    %53 = vector.multi_reduction <maximumf>, %42, %cst_27 [1] : vector<4x128xf32> to vector<4xf32>
    %54 = vector.shape_cast %53 : vector<4xf32> to vector<4x1xf32>
    %55 = arith.maximumf %52, %54 : vector<4x1xf32>
    %56 = arith.subf %52, %55 : vector<4x1xf32>
    %57 = math.exp %56 : vector<4x1xf32>
    %58 = vector.broadcast %55 : vector<4x1xf32> to vector<4x128xf32>
    %59 = arith.subf %42, %58 : vector<4x128xf32>
    %60 = math.exp %59 : vector<4x128xf32>
    %61 = arith.mulf %60, %51 : vector<4x128xf32>
    %c0_28 = arith.constant 0 : index
    %c0_29 = arith.constant 0 : index
    %62 = vector.load %arg15[%c0_28, %c0_29] : memref<4x1xf32, #tpu.memory_space<vmem>>, vector<4x1xf32>
    %63 = arith.mulf %57, %62 : vector<4x1xf32>
    %cst_30 = arith.constant dense<0.000000e+00> : vector<4xf32>
    %64 = vector.multi_reduction <add>, %61, %cst_30 [1] : vector<4x128xf32> to vector<4xf32>
    %65 = vector.shape_cast %64 : vector<4xf32> to vector<4x1xf32>
    %66 = arith.addf %63, %65 : vector<4x1xf32>
    %c0_31 = arith.constant 0 : index
    %c0_32 = arith.constant 0 : index
    %67 = vector.load %arg15[%c0_31, %c0_32] : memref<4x1xf32, #tpu.memory_space<vmem>>, vector<4x1xf32>
    tpu.vector_store %arg15[%c0_31, %c0_32], %66 {strides = array<i32>} : memref<4x1xf32, #tpu.memory_space<vmem>>, vector<4x1xf32>,
    %c0_33 = arith.constant 0 : index
    %c0_34 = arith.constant 0 : index
    %68 = vector.load %arg16[%c0_33, %c0_34] : memref<4x128xf32, #tpu.memory_space<vmem>>, vector<4x128xf32>
    %69 = vector.broadcast %57 : vector<4x1xf32> to vector<4x128xf32>
    %70 = arith.mulf %69, %68 : vector<4x128xf32>
    %71 = arith.truncf %61 : vector<4x128xf32> to vector<4x128xbf16>
    %72 = arith.truncf %31 : vector<128x128xf32> to vector<128x128xbf16>
    %cst_35 = arith.constant dense<0.000000e+00> : vector<4x128xf32>
    %73 = tpu.matmul %71, %72, %cst_35 {dimension_numbers = #tpu.dot_dimension_numbers<[1], [0], [0], [1], [0, 0, 1, 1], [], []>} : vector<4x128xbf16>, vector<128x128xbf16>, vector<4x128xf32> -> vector<4x128xf32>
    %74 = arith.addf %70, %73 : vector<4x128xf32>
    %c0_36 = arith.constant 0 : index
    %c0_37 = arith.constant 0 : index
    %75 = vector.load %arg16[%c0_36, %c0_37] : memref<4x128xf32, #tpu.memory_space<vmem>>, vector<4x128xf32>
    tpu.vector_store %arg16[%c0_36, %c0_37], %74 {strides = array<i32>} : memref<4x128xf32, #tpu.memory_space<vmem>>, vector<4x128xf32>,
    %c0_38 = arith.constant 0 : index
    %c0_39 = arith.constant 0 : index
    %76 = vector.load %arg14[%c0_38, %c0_39] : memref<4x1xf32, #tpu.memory_space<vmem>>, vector<4x1xf32>
    tpu.vector_store %arg14[%c0_38, %c0_39], %55 {strides = array<i32>} : memref<4x1xf32, #tpu.memory_space<vmem>>, vector<4x1xf32>,
    %c1_i32 = arith.constant 1 : i32
    %77 = arith.cmpi eq, %arg0, %c1_i32 : i32
    %78 = arith.extui %77 : i1 to i32
    %c0_i32_40 = arith.constant 0 : i32
    %79 = arith.cmpi ne, %78, %c0_i32_40 : i32
    scf.if %79 {
      %c0_41 = arith.constant 0 : index
      %c0_42 = arith.constant 0 : index
      %80 = vector.load %arg16[%c0_41, %c0_42] : memref<4x128xf32, #tpu.memory_space<vmem>>, vector<4x128xf32>
      %c0_43 = arith.constant 0 : index
      %c0_44 = arith.constant 0 : index
      %81 = vector.load %arg15[%c0_43, %c0_44] : memref<4x1xf32, #tpu.memory_space<vmem>>, vector<4x1xf32>
      %82 = tpu.reciprocal %81 {approx = true} : vector<4x1xf32> -> vector<4x1xf32>
      %83 = vector.broadcast %82 : vector<4x1xf32> to vector<4x128xf32>
      %84 = arith.mulf %80, %83 : vector<4x128xf32>
      %c0_45 = arith.constant 0 : index
      %c0_46 = arith.constant 0 : index
      %85 = vector.load %arg11[%c0_45, %c0_46] : memref<1x4xf32, #tpu.memory_space<vmem>>, vector<1x4xf32>
      %86 = vector.extract_strided_slice %84 {offsets = [0, 0], sizes = [1, 128], strides = [1, 1]} : vector<4x128xf32> to vector<1x128xf32>
      %c0_47 = arith.constant 0 : index
      %c0_48 = arith.constant 0 : index
      %87 = vector.load %arg10[%c0_47, %c0_48] : memref<512x4xf32, #tpu.memory_space<vmem>>, vector<128x4xf32>
      %cst_49 = arith.constant dense<0.000000e+00> : vector<1x4xf32>
      %88 = tpu.matmul %86, %87, %cst_49 {dimension_numbers = #tpu.dot_dimension_numbers<[1], [0], [0], [1], [0, 0, 1, 1], [], []>} : vector<1x128xf32>, vector<128x4xf32>, vector<1x4xf32> -> vector<1x4xf32>
      %89 = arith.addf %85, %88 : vector<1x4xf32>
      %90 = vector.extract_strided_slice %84 {offsets = [1, 0], sizes = [1, 128], strides = [1, 1]} : vector<4x128xf32> to vector<1x128xf32>
      %c128 = arith.constant 128 : index
      %c0_50 = arith.constant 0 : index
      %91 = vector.load %arg10[%c128, %c0_50] : memref<512x4xf32, #tpu.memory_space<vmem>>, vector<128x4xf32>
      %cst_51 = arith.constant dense<0.000000e+00> : vector<1x4xf32>
      %92 = tpu.matmul %90, %91, %cst_51 {dimension_numbers = #tpu.dot_dimension_numbers<[1], [0], [0], [1], [0, 0, 1, 1], [], []>} : vector<1x128xf32>, vector<128x4xf32>, vector<1x4xf32> -> vector<1x4xf32>
      %93 = arith.addf %89, %92 : vector<1x4xf32>
      %94 = vector.extract_strided_slice %84 {offsets = [2, 0], sizes = [1, 128], strides = [1, 1]} : vector<4x128xf32> to vector<1x128xf32>
      %c256 = arith.constant 256 : index
      %c0_52 = arith.constant 0 : index
      %95 = vector.load %arg10[%c256, %c0_52] : memref<512x4xf32, #tpu.memory_space<vmem>>, vector<128x4xf32>
      %cst_53 = arith.constant dense<0.000000e+00> : vector<1x4xf32>
      %96 = tpu.matmul %94, %95, %cst_53 {dimension_numbers = #tpu.dot_dimension_numbers<[1], [0], [0], [1], [0, 0, 1, 1], [], []>} : vector<1x128xf32>, vector<128x4xf32>, vector<1x4xf32> -> vector<1x4xf32>
      %97 = arith.addf %93, %96 : vector<1x4xf32>
      %98 = vector.extract_strided_slice %84 {offsets = [3, 0], sizes = [1, 128], strides = [1, 1]} : vector<4x128xf32> to vector<1x128xf32>
      %c384 = arith.constant 384 : index
      %c0_54 = arith.constant 0 : index
      %99 = vector.load %arg10[%c384, %c0_54] : memref<512x4xf32, #tpu.memory_space<vmem>>, vector<128x4xf32>
      %cst_55 = arith.constant dense<0.000000e+00> : vector<1x4xf32>
      %100 = tpu.matmul %98, %99, %cst_55 {dimension_numbers = #tpu.dot_dimension_numbers<[1], [0], [0], [1], [0, 0, 1, 1], [], []>} : vector<1x128xf32>, vector<128x4xf32>, vector<1x4xf32> -> vector<1x4xf32>
      %101 = arith.addf %97, %100 : vector<1x4xf32>
      %c0_56 = arith.constant 0 : index
      %c0_57 = arith.constant 0 : index
      %102 = vector.load %arg12[%c0_56, %c0_57] : memref<1x4xf32, #tpu.memory_space<vmem>>, vector<1x4xf32>
      tpu.vector_store %arg12[%c0_56, %c0_57], %101 {strides = array<i32>} : memref<1x4xf32, #tpu.memory_space<vmem>>, vector<1x4xf32>,
    } else {
    }
    return
  }
  func.func @transform_0(%arg0: i32, %arg1: memref<1xi32, #tpu.memory_space<smem>>) -> (i32, i32) {
    %c0_i32 = arith.constant 0 : i32
    %c0_i32_0 = arith.constant 0 : i32
    return %arg0, %c0_i32 : i32, i32
  }
  func.func @transform_1(%arg0: i32, %arg1: memref<1xi32, #tpu.memory_space<smem>>) -> (i32, i32) {
    %c0_i32 = arith.constant 0 : i32
    %c0_i32_0 = arith.constant 0 : i32
    %c0_i32_1 = arith.constant 0 : i32
    return %c0_i32, %c0_i32_0 : i32, i32
  }
  func.func @transform_2(%arg0: i32, %arg1: memref<1xi32, #tpu.memory_space<smem>>) -> (i32, i32) {
    %c0_i32 = arith.constant 0 : i32
    %c0_i32_0 = arith.constant 0 : i32
    %c0_i32_1 = arith.constant 0 : i32
    return %c0_i32, %c0_i32_0 : i32, i32
  }
  func.func @transform_3(%arg0: i32, %arg1: memref<1xi32, #tpu.memory_space<smem>>) -> (i32, i32) {
    %c0_i32 = arith.constant 0 : i32
    %c0_i32_0 = arith.constant 0 : i32
    %c0_i32_1 = arith.constant 0 : i32
    return %c0_i32, %c0_i32_0 : i32, i32
  }
  func.func @transform_4(%arg0: i32, %arg1: memref<1xi32, #tpu.memory_space<smem>>) -> (i32, i32) {
    %c0_i32 = arith.constant 0 : i32
    %c0_i32_0 = arith.constant 0 : i32
    %c0_i32_1 = arith.constant 0 : i32
    return %c0_i32, %c0_i32_0 : i32, i32
  }
  func.func @transform_5(%arg0: i32, %arg1: memref<1xi32, #tpu.memory_space<smem>>) -> (i32, i32) {
    %c0_i32 = arith.constant 0 : i32
    %c0_i32_0 = arith.constant 0 : i32
    %c0_i32_1 = arith.constant 0 : i32
    return %c0_i32, %c0_i32_0 : i32, i32
  }
  func.func @transform_6(%arg0: i32, %arg1: memref<1xi32, #tpu.memory_space<smem>>) -> (i32, i32) {
    %c0_i32 = arith.constant 0 : i32
    %c0_i32_0 = arith.constant 0 : i32
    %c0_i32_1 = arith.constant 0 : i32
    return %c0_i32, %c0_i32_0 : i32, i32
  }
  func.func @transform_7(%arg0: i32, %arg1: memref<1xi32, #tpu.memory_space<smem>>) -> (i32, i32) {
    %c0_i32 = arith.constant 0 : i32
    %c0_i32_0 = arith.constant 0 : i32
    %c0_i32_1 = arith.constant 0 : i32
    return %c0_i32, %c0_i32_0 : i32, i32
  }
  func.func @transform_8(%arg0: i32, %arg1: memref<1xi32, #tpu.memory_space<smem>>) -> (i32, i32) {
    %c0_i32 = arith.constant 0 : i32
    %c0_i32_0 = arith.constant 0 : i32
    %c0_i32_1 = arith.constant 0 : i32
    return %c0_i32, %c0_i32_0 : i32, i32
  }
  func.func @transform_9(%arg0: i32, %arg1: memref<1xi32, #tpu.memory_space<smem>>) -> (i32, i32) {
    %c0_i32 = arith.constant 0 : i32
    %c0_i32_0 = arith.constant 0 : i32
    %c0_i32_1 = arith.constant 0 : i32
    return %c0_i32, %c0_i32_0 : i32, i32
  }
  func.func @transform_10(%arg0: i32, %arg1: memref<1xi32, #tpu.memory_space<smem>>) -> (i32, i32) {
    %c0_i32 = arith.constant 0 : i32
    %c0_i32_0 = arith.constant 0 : i32
    %c0_i32_1 = arith.constant 0 : i32
    return %c0_i32, %c0_i32_0 : i32, i32
  }
}

</mosaic_0001>

<llo_original>
// kernel: tpu_custom_call.1
$region0: #{tpu_custom_call.1}
  #allocation0 [shape = 'u32[]', space=smem, size = 0x4, offset = 0x4, fixed_abs, tag = 'smem constant byte address 0x4 - core index']
  #allocation1 [shape = 'u32[72,128]{1,0:T(1,128)}', space=vmem, size = 0x9000, scoped, tag = 'internal scratch']
  #allocation2 [shape = 'f32[4,128]{1,0:T(4,128)}', space=vmem, size = 0x800, scoped, tag = 'scratch operand']
  #allocation3 [shape = 'f32[4,1]{1,0:T(4,128)}', space=vmem, size = 0x800, scoped, tag = 'scratch operand']
  #allocation4 [shape = 'f32[4,1]{1,0:T(4,128)}', space=vmem, size = 0x800, scoped, tag = 'scratch operand']
  #allocation5 [shape = 'f32[4,128]{1,0:T(4,128)}', space=vmem, size = 0x800, scoped, tag = 'scratch operand']
  #allocation6 [shape = 's32[1]{0}', space=sflag, size = 0x4, scoped, tag = 'scoped memory for tpu_custom_call.1']
  #allocation7 [shape = 's32[1]{0:T(128)S(6)}', space=smem, size = 0x200, scoped, tag = 'prefetched SMEM operand 0']
  %s0 = inlined_call_operand.<no memory space> [shape: s32[1], index: 0, kind: input, shape index: {}]
  %s1 = inlined_call_operand.vmem [shape: f32[256,128], index: 1, kind: input, shape index: {}]
  %s2 = inlined_call_operand.vmem [shape: f32[4,128], index: 2, kind: input, shape index: {}]
  %s3 = inlined_call_operand.vmem [shape: f32[1,128], index: 3, kind: input, shape index: {}]
  %s4 = inlined_call_operand.vmem [shape: f32[1,128], index: 4, kind: input, shape index: {}]
  %s5 = inlined_call_operand.vmem [shape: bf16[128,128], index: 5, kind: input, shape index: {}]
  %s6 = inlined_call_operand.vmem [shape: f32[1,128], index: 6, kind: input, shape index: {}]
  %s7 = inlined_call_operand.vmem [shape: bf16[128,128], index: 7, kind: input, shape index: {}]
  %s8 = inlined_call_operand.vmem [shape: f32[1,128], index: 8, kind: input, shape index: {}]
  %s9 = inlined_call_operand.vmem [shape: f32[512,4], index: 9, kind: input, shape index: {}]
  %s10 = inlined_call_operand.vmem [shape: f32[1,4], index: 10, kind: input, shape index: {}]
  %s11 = inlined_call_operand.hbm [shape: f32[1,4], index: 11, kind: output, shape index: {}]
  %s12 = sld [smem:[#allocation0]]
  $region81: #{tpu_custom_call.1} parent=0
    _
  %s14 = ssub.s32 1, %s12
  %s15 = scalar_select 0, %s14, %s12
  %16 = sst [smem:[#allocation7]] %s0
  $region1: #{tpu_custom_call.1} parent=0
    #allocation8 [shape = 'u8[512]{0}', space=vmem, size = 0x400, scoped, tag = 'output window, operand 0, single buffered']
    #allocation9 [shape = 's32[2]{0}', space=sflag, size = 0x8, scoped, tag = 'scoped memory for tpu_custom_call.1']
    %17 = vsyncpa [#allocation9], 0
    loop: start=0, step=1, limit=4
    $region2: #{tpu_custom_call.1} parent=1 // loop_pre_header
      _
    $region3: #{tpu_custom_call.1} parent=1 // loop_header
      %s19 = sphi 0, %s23
      %p20 = scmp.ge.s32.totalorder %s19, 4
      %s29 = sphi 0, %s31
      %s32 = sphi 0, %s29
      %s33 = sphi 0, %s32
      %s49 = sphi 0, %s33
      %s53 = sphi 0, %s53
      %s55 = sphi 0, %s53
      %s56 = sphi 0, %s55
      %s70 = sphi 0, %s56
      %s74 = sphi 0, %s74
      %s76 = sphi 0, %s74
      %s77 = sphi 0, %s76
      %s91 = sphi 0, %s77
      %s95 = sphi 0, %s95
      %s97 = sphi 0, %s95
      %s98 = sphi 0, %s97
      %s112 = sphi 0, %s98
      %s116 = sphi 0, %s116
      %s118 = sphi 0, %s116
      %s119 = sphi 0, %s118
      %s133 = sphi 0, %s119
      %s137 = sphi 0, %s137
      %s139 = sphi 0, %s137
      %s140 = sphi 0, %s139
      %s154 = sphi 0, %s140
      %s158 = sphi 0, %s158
      %s160 = sphi 0, %s158
      %s161 = sphi 0, %s160
      %s175 = sphi 0, %s161
      %s179 = sphi 0, %s179
      %s181 = sphi 0, %s179
      %s182 = sphi 0, %s181
      %s196 = sphi 0, %s182
      %s200 = sphi 0, %s200
      %s202 = sphi 0, %s200
      %s203 = sphi 0, %s202
      %s217 = sphi 0, %s203
      %s221 = sphi 0, %s221
      %s223 = sphi 0, %s221
      %s224 = sphi 0, %s223
      %s238 = sphi 0, %s224
      %s242 = sphi 0, %s242
      %s244 = sphi 0, %s242
      %s245 = sphi 0, %s244
      %s259 = sphi 0, %s245
    $region4: #{tpu_custom_call.1} parent=1 // loop_header_branch
      %22 = sbr.rel (%p20) target = $region8
    $region5: #{tpu_custom_call.1} parent=1 // loop_body
      %s24 = ssub.s32 %s19, 1
      %s25 = ssub.s32 %s19, 2
      %s26 = sadd.s32 %s19, 1
      %s27 = ssub.s32 %s19, %s26
      %p28 = scmp.eq.s32.totalorder %s27, 0
      %s30 = sadd.s32 %s29, 1
      %s31 = scalar_select %p28, %s29, %s30
      %p34 = pneg %p28
      %p35 = scmp.eq.s32.totalorder %s19, 1
      %p36 = por %p34, %p35
      %p37 = scmp.ne.s32.totalorder %s29, %s32
      %p38 = scmp.eq.s32.totalorder %s19, 0
      %p39 = por %p37, %p38
      %p40 = scmp.ne.s32.totalorder %s29, %s32
      %p41 = scmp.eq.s32.totalorder %s24, 1
      %p42 = por %p40, %p41
      %p43 = scmp.ne.s32.totalorder %s32, %s33
      %p44 = scmp.eq.s32.totalorder %s24, 0
      %p45 = por %p43, %p44
      %p46 = scmp.ne.s32.totalorder %s32, %s33
      %p47 = scmp.eq.s32.totalorder %s25, 1
      %p48 = por %p46, %p47
      %p50 = scmp.ne.s32.totalorder %s33, %s49
      %p51 = scmp.eq.s32.totalorder %s25, 0
      %p52 = por %p50, %p51
      %s54 = sadd.s32 %s53, 1
      %p57 = scmp.eq.s32.totalorder %s19, 1
      %p58 = scmp.ne.s32.totalorder %s53, %s55
      %p59 = scmp.eq.s32.totalorder %s19, 0
      %p60 = por %p58, %p59
      %p61 = scmp.ne.s32.totalorder %s53, %s55
      %p62 = scmp.eq.s32.totalorder %s24, 1
      %p63 = por %p61, %p62
      %p64 = scmp.ne.s32.totalorder %s55, %s56
      %p65 = scmp.eq.s32.totalorder %s24, 0
      %p66 = por %p64, %p65
      %p67 = scmp.ne.s32.totalorder %s55, %s56
      %p68 = scmp.eq.s32.totalorder %s25, 1
      %p69 = por %p67, %p68
      %p71 = scmp.ne.s32.totalorder %s56, %s70
      %p72 = scmp.eq.s32.totalorder %s25, 0
      %p73 = por %p71, %p72
      %s75 = sadd.s32 %s74, 1
      %p78 = scmp.eq.s32.totalorder %s19, 1
      %p79 = scmp.ne.s32.totalorder %s74, %s76
      %p80 = scmp.eq.s32.totalorder %s19, 0
      %p81 = por %p79, %p80
      %p82 = scmp.ne.s32.totalorder %s74, %s76
      %p83 = scmp.eq.s32.totalorder %s24, 1
      %p84 = por %p82, %p83
      %p85 = scmp.ne.s32.totalorder %s76, %s77
      %p86 = scmp.eq.s32.totalorder %s24, 0
      %p87 = por %p85, %p86
      %p88 = scmp.ne.s32.totalorder %s76, %s77
      %p89 = scmp.eq.s32.totalorder %s25, 1
      %p90 = por %p88, %p89
      %p92 = scmp.ne.s32.totalorder %s77, %s91
      %p93 = scmp.eq.s32.totalorder %s25, 0
      %p94 = por %p92, %p93
      %s96 = sadd.s32 %s95, 1
      %p99 = scmp.eq.s32.totalorder %s19, 1
      %p100 = scmp.ne.s32.totalorder %s95, %s97
      %p101 = scmp.eq.s32.totalorder %s19, 0
      %p102 = por %p100, %p101
      %p103 = scmp.ne.s32.totalorder %s95, %s97
      %p104 = scmp.eq.s32.totalorder %s24, 1
      %p105 = por %p103, %p104
      %p106 = scmp.ne.s32.totalorder %s97, %s98
      %p107 = scmp.eq.s32.totalorder %s24, 0
      %p108 = por %p106, %p107
      %p109 = scmp.ne.s32.totalorder %s97, %s98
      %p110 = scmp.eq.s32.totalorder %s25, 1
      %p111 = por %p109, %p110
      %p113 = scmp.ne.s32.totalorder %s98, %s112
      %p114 = scmp.eq.s32.totalorder %s25, 0
      %p115 = por %p113, %p114
      %s117 = sadd.s32 %s116, 1
      %p120 = scmp.eq.s32.totalorder %s19, 1
      %p121 = scmp.ne.s32.totalorder %s116, %s118
      %p122 = scmp.eq.s32.totalorder %s19, 0
      %p123 = por %p121, %p122
      %p124 = scmp.ne.s32.totalorder %s116, %s118
      %p125 = scmp.eq.s32.totalorder %s24, 1
      %p126 = por %p124, %p125
      %p127 = scmp.ne.s32.totalorder %s118, %s119
      %p128 = scmp.eq.s32.totalorder %s24, 0
      %p129 = por %p127, %p128
      %p130 = scmp.ne.s32.totalorder %s118, %s119
      %p131 = scmp.eq.s32.totalorder %s25, 1
      %p132 = por %p130, %p131
      %p134 = scmp.ne.s32.totalorder %s119, %s133
      %p135 = scmp.eq.s32.totalorder %s25, 0
      %p136 = por %p134, %p135
      %s138 = sadd.s32 %s137, 1
      %p141 = scmp.eq.s32.totalorder %s19, 1
      %p142 = scmp.ne.s32.totalorder %s137, %s139
      %p143 = scmp.eq.s32.totalorder %s19, 0
      %p144 = por %p142, %p143
      %p145 = scmp.ne.s32.totalorder %s137, %s139
      %p146 = scmp.eq.s32.totalorder %s24, 1
      %p147 = por %p145, %p146
      %p148 = scmp.ne.s32.totalorder %s139, %s140
      %p149 = scmp.eq.s32.totalorder %s24, 0
      %p150 = por %p148, %p149
      %p151 = scmp.ne.s32.totalorder %s139, %s140
      %p152 = scmp.eq.s32.totalorder %s25, 1
      %p153 = por %p151, %p152
      %p155 = scmp.ne.s32.totalorder %s140, %s154
      %p156 = scmp.eq.s32.totalorder %s25, 0
      %p157 = por %p155, %p156
      %s159 = sadd.s32 %s158, 1
      %p162 = scmp.eq.s32.totalorder %s19, 1
      %p163 = scmp.ne.s32.totalorder %s158, %s160
      %p164 = scmp.eq.s32.totalorder %s19, 0
      %p165 = por %p163, %p164
      %p166 = scmp.ne.s32.totalorder %s158, %s160
      %p167 = scmp.eq.s32.totalorder %s24, 1
      %p168 = por %p166, %p167
      %p169 = scmp.ne.s32.totalorder %s160, %s161
      %p170 = scmp.eq.s32.totalorder %s24, 0
      %p171 = por %p169, %p170
      %p172 = scmp.ne.s32.totalorder %s160, %s161
      %p173 = scmp.eq.s32.totalorder %s25, 1
      %p174 = por %p172, %p173
      %p176 = scmp.ne.s32.totalorder %s161, %s175
      %p177 = scmp.eq.s32.totalorder %s25, 0
      %p178 = por %p176, %p177
      %s180 = sadd.s32 %s179, 1
      %p183 = scmp.eq.s32.totalorder %s19, 1
      %p184 = scmp.ne.s32.totalorder %s179, %s181
      %p185 = scmp.eq.s32.totalorder %s19, 0
      %p186 = por %p184, %p185
      %p187 = scmp.ne.s32.totalorder %s179, %s181
      %p188 = scmp.eq.s32.totalorder %s24, 1
      %p189 = por %p187, %p188
      %p190 = scmp.ne.s32.totalorder %s181, %s182
      %p191 = scmp.eq.s32.totalorder %s24, 0
      %p192 = por %p190, %p191
      %p193 = scmp.ne.s32.totalorder %s181, %s182
      %p194 = scmp.eq.s32.totalorder %s25, 1
      %p195 = por %p193, %p194
      %p197 = scmp.ne.s32.totalorder %s182, %s196
      %p198 = scmp.eq.s32.totalorder %s25, 0
      %p199 = por %p197, %p198
      %s201 = sadd.s32 %s200, 1
      %p204 = scmp.eq.s32.totalorder %s19, 1
      %p205 = scmp.ne.s32.totalorder %s200, %s202
      %p206 = scmp.eq.s32.totalorder %s19, 0
      %p207 = por %p205, %p206
      %p208 = scmp.ne.s32.totalorder %s200, %s202
      %p209 = scmp.eq.s32.totalorder %s24, 1
      %p210 = por %p208, %p209
      %p211 = scmp.ne.s32.totalorder %s202, %s203
      %p212 = scmp.eq.s32.totalorder %s24, 0
      %p213 = por %p211, %p212
      %p214 = scmp.ne.s32.totalorder %s202, %s203
      %p215 = scmp.eq.s32.totalorder %s25, 1
      %p216 = por %p214, %p215
      %p218 = scmp.ne.s32.totalorder %s203, %s217
      %p219 = scmp.eq.s32.totalorder %s25, 0
      %p220 = por %p218, %p219
      %s222 = sadd.s32 %s221, 1
      %p225 = scmp.eq.s32.totalorder %s19, 1
      %p226 = scmp.ne.s32.totalorder %s221, %s223
      %p227 = scmp.eq.s32.totalorder %s19, 0
      %p228 = por %p226, %p227
      %p229 = scmp.ne.s32.totalorder %s221, %s223
      %p230 = scmp.eq.s32.totalorder %s24, 1
      %p231 = por %p229, %p230
      %p232 = scmp.ne.s32.totalorder %s223, %s224
      %p233 = scmp.eq.s32.totalorder %s24, 0
      %p234 = por %p232, %p233
      %p235 = scmp.ne.s32.totalorder %s223, %s224
      %p236 = scmp.eq.s32.totalorder %s25, 1
      %p237 = por %p235, %p236
      %p239 = scmp.ne.s32.totalorder %s224, %s238
      %p240 = scmp.eq.s32.totalorder %s25, 0
      %p241 = por %p239, %p240
      %s243 = sadd.s32 %s242, 1
      %p246 = scmp.eq.s32.totalorder %s19, 1
      %p247 = scmp.ne.s32.totalorder %s242, %s244
      %p248 = scmp.eq.s32.totalorder %s19, 0
      %p249 = por %p247, %p248
      %p250 = scmp.ne.s32.totalorder %s242, %s244
      %p251 = scmp.eq.s32.totalorder %s24, 1
      %p252 = por %p250, %p251
      %p253 = scmp.ne.s32.totalorder %s244, %s245
      %p254 = scmp.eq.s32.totalorder %s24, 0
      %p255 = por %p253, %p254
      %p256 = scmp.ne.s32.totalorder %s244, %s245
      %p257 = scmp.eq.s32.totalorder %s25, 1
      %p258 = por %p256, %p257
      %p260 = scmp.ne.s32.totalorder %s245, %s259
      %p261 = scmp.eq.s32.totalorder %s25, 0
      %p262 = por %p260, %p261
      %p263 = scmp.le.s32.totalorder 1, %s19
      %p264 = scmp.lt.s32.totalorder %s19, 3
      %p265 = pnand %p263, %p264
      %p266 = pneg %p265
      // Predicated region
      $region9: #{tpu_custom_call.1} parent=5 // pred_check
        _
      $region10: #{tpu_custom_call.1} parent=5 // pred_check_branch
        %268 = sbr.rel (%p265) target = $region12
      $region11: #{tpu_custom_call.1} parent=5 // pred_region
        %s269 = ssub.s32 %s19, 1
        // Predicated region
        $region13: #{tpu_custom_call.1} parent=11 // pred_check
          %p270 = pneg %p66
        $region14: #{tpu_custom_call.1} parent=11 // pred_check_branch
          %272 = sbr.rel (%p270) target = $region16
        $region15: #{tpu_custom_call.1} parent=11 // pred_region
          _
        $region16: #{tpu_custom_call.1} parent=11 // pred_fallthru
          _
        // Predicated region
        $region17: #{tpu_custom_call.1} parent=11 // pred_check
          %p273 = pneg %p87
        $region18: #{tpu_custom_call.1} parent=11 // pred_check_branch
          %275 = sbr.rel (%p273) target = $region20
        $region19: #{tpu_custom_call.1} parent=11 // pred_region
          _
        $region20: #{tpu_custom_call.1} parent=11 // pred_fallthru
          _
        // Predicated region
        $region21: #{tpu_custom_call.1} parent=11 // pred_check
          %p276 = pneg %p108
        $region22: #{tpu_custom_call.1} parent=11 // pred_check_branch
          %278 = sbr.rel (%p276) target = $region24
        $region23: #{tpu_custom_call.1} parent=11 // pred_region
          _
        $region24: #{tpu_custom_call.1} parent=11 // pred_fallthru
          _
        // Predicated region
        $region25: #{tpu_custom_call.1} parent=11 // pred_check
          %p279 = pneg %p129
        $region26: #{tpu_custom_call.1} parent=11 // pred_check_branch
          %281 = sbr.rel (%p279) target = $region28
        $region27: #{tpu_custom_call.1} parent=11 // pred_region
          _
        $region28: #{tpu_custom_call.1} parent=11 // pred_fallthru
          _
        // Predicated region
        $region29: #{tpu_custom_call.1} parent=11 // pred_check
          %p282 = pneg %p150
        $region30: #{tpu_custom_call.1} parent=11 // pred_check_branch
          %284 = sbr.rel (%p282) target = $region32
        $region31: #{tpu_custom_call.1} parent=11 // pred_region
          _
        $region32: #{tpu_custom_call.1} parent=11 // pred_fallthru
          _
        // Predicated region
        $region33: #{tpu_custom_call.1} parent=11 // pred_check
          %p285 = pneg %p171
        $region34: #{tpu_custom_call.1} parent=11 // pred_check_branch
          %287 = sbr.rel (%p285) target = $region36
        $region35: #{tpu_custom_call.1} parent=11 // pred_region
          _
        $region36: #{tpu_custom_call.1} parent=11 // pred_fallthru
          _
        // Predicated region
        $region37: #{tpu_custom_call.1} parent=11 // pred_check
          %p288 = pneg %p192
        $region38: #{tpu_custom_call.1} parent=11 // pred_check_branch
          %290 = sbr.rel (%p288) target = $region40
        $region39: #{tpu_custom_call.1} parent=11 // pred_region
          _
        $region40: #{tpu_custom_call.1} parent=11 // pred_fallthru
          _
        // Predicated region
        $region41: #{tpu_custom_call.1} parent=11 // pred_check
          %p291 = pneg %p213
        $region42: #{tpu_custom_call.1} parent=11 // pred_check_branch
          %293 = sbr.rel (%p291) target = $region44
        $region43: #{tpu_custom_call.1} parent=11 // pred_region
          _
        $region44: #{tpu_custom_call.1} parent=11 // pred_fallthru
          _
        // Predicated region
        $region45: #{tpu_custom_call.1} parent=11 // pred_check
          %p294 = pneg %p234
        $region46: #{tpu_custom_call.1} parent=11 // pred_check_branch
          %296 = sbr.rel (%p294) target = $region48
        $region47: #{tpu_custom_call.1} parent=11 // pred_region
          _
        $region48: #{tpu_custom_call.1} parent=11 // pred_fallthru
          _
      $region12: #{tpu_custom_call.1} parent=5 // pred_fallthru
        _
      %p297 = scmp.lt.s32.totalorder %s19, 2
      // Predicated region
      $region49: #{tpu_custom_call.1} parent=5 // pred_check
        %p298 = pneg %p297
      $region50: #{tpu_custom_call.1} parent=5 // pred_check_branch
        %300 = sbr.rel (%p298) target = $region52
      $region51: #{tpu_custom_call.1} parent=5 // pred_region
        // Predicated region
        $region53: #{tpu_custom_call.1} parent=51 // pred_check
          %p301 = pneg %p39
        $region54: #{tpu_custom_call.1} parent=51 // pred_check_branch
          %303 = sbr.rel (%p301) target = $region56
        $region55: #{tpu_custom_call.1} parent=51 // pred_region
          %s304 = smul.u32 16, %s19
          %p305 = scmp.lt.s32.totalorder %s304, 31
          %s306 = scalar_select %p305, %s304, 31
          %s307 = smul.addr %s306, 8
          %s308 = scalar_lea.vmem %s1, %s307
          %s309 = smul.u32 16, %s19
        $region56: #{tpu_custom_call.1} parent=51 // pred_fallthru
          _
      $region52: #{tpu_custom_call.1} parent=5 // pred_fallthru
        _
      %p310 = scmp.le.s32.totalorder 1, %s19
      %p311 = scmp.lt.s32.totalorder %s19, 3
      %p312 = pnand %p310, %p311
      %p313 = pneg %p312
      // Predicated region
      $region57: #{tpu_custom_call.1} parent=5 // pred_check
        _
      $region58: #{tpu_custom_call.1} parent=5 // pred_check_branch
        %315 = sbr.rel (%p312) target = $region60
      $region59: #{tpu_custom_call.1} parent=5 // pred_region
        %s316 = ssub.s32 %s19, 1
        %s317 = smul.u32 16, %s24
        %p318 = scmp.lt.s32.totalorder %s317, 31
        %s319 = scalar_select %p318, %s317, 31
        %s320 = smul.addr %s319, 8
        %s321 = scalar_lea.vmem %s1, %s320
        %p322 = pneg %p45
        %p323 = pneg %p42
        %p324 = pneg %p66
        %p325 = pneg %p63
        %p326 = pneg %p87
        %p327 = pneg %p84
        %p328 = pneg %p108
        %p329 = pneg %p105
        %p330 = pneg %p129
        %p331 = pneg %p126
        %p332 = pneg %p150
        %p333 = pneg %p147
        %p334 = pneg %p171
        %p335 = pneg %p168
        %p336 = pneg %p192
        %p337 = pneg %p189
        %p338 = pneg %p213
        %p339 = pneg %p210
        %p340 = pneg %p234
        %p341 = pneg %p231
        %p342 = pneg %p255
        %p343 = pneg %p252
        %s344 = smul.u32 16, %s24
        %p345 = scmp.lt.s32.totalorder %s344, 31
        %s346 = scalar_select %p345, %s344, 31
        %s347 = smul.addr %s346, 8
        %s348 = scalar_lea.vmem %s1, %s347
        %s349 = smul.u32 16, %s24
        %v350 = vld [vmem:[%s3] sm:$0x1]
        %v351 = vld [vmem:[%s4] sm:$0x1]
        %p352 = scmp.eq.s32.totalorder %s24, 0
        // Predicated region
        $region61: #{tpu_custom_call.1} parent=59 // pred_check
          %p353 = pneg %p352
        $region62: #{tpu_custom_call.1} parent=59 // pred_check_branch
          %355 = sbr.rel (%p353) target = $region64
        $region63: #{tpu_custom_call.1} parent=59 // pred_region
          %vm356 = vcmask 3072
          %357 = vst.msk [vmem:[#allocation3] sm:$0xf] %vm356, -inf
          %358 = vst.msk [vmem:[#allocation4] sm:$0xf] %vm356, 0.0
          %359 = vst [vmem:[#allocation5] sm:$0xf] 0.0
          %v360 = vld [vmem:[%s2] sm:$0xf]
          %vm361 = vcmask 1043456
          %v362 = vsel %vm361, %v360, 0.0
          %363 = vadd.xlane.f32.xlu0 %v362
          %v364 = vpop.xlane.xlu0 %363
          %v365 = vrcp.pop 128.0
          %v366 = vmul.f32 128.0, %v365
          %v367 = vsub.f32 1.0, %v366
          %v368 = vmul.f32 %v365, %v367
          %v369 = vadd.f32 %v365, %v368
          %vm370 = vweird.f32 %v365
          %v371 = vsel %vm370, %v365, %v369
          %v372 = vmul.f32 %v364, %v371
          %v373 = vsub.f32 %v360, %v372
          %v374 = vmul.f32 %v373, %v373
          %v375 = vsel %vm361, %v374, 0.0
          %376 = vadd.xlane.f32.xlu0 %v375
          %v377 = vpop.xlane.xlu0 %376
          %v378 = vmul.f32 %v377, %v371
          %v379 = vadd.f32 %v378, 1e-05
          %v380 = vrsqrt.pop %v379
          %v381 = vmul.f32 %v380, %v379
          %v382 = vmul.f32 %v381, %v380
          %v383 = vmul.f32 0.5, %v382
          %v384 = vsub.f32 1.5, %v383
          %v385 = vmul.f32 %v380, %v384
          %vm386 = vweird.f32 %v379
          %vm387 = vweird.f32 %v380
          %vm388 = vmor %vm386, %vm387
          %v389 = vsel %vm388, %v380, %v385
          %v390 = vmul.f32 %v373, %v389
          %v392 = vperm.slane %v350, 0
          %v394 = vmul.f32 %v390, %v392
          %v396 = vperm.slane %v351, 0
          %v398 = vadd.f32 %v394, %v396
          %v399 = vpack.c.bf16 %v398, %v398
          %v400 = vld [vmem:[%s5] sm:$0xf]
          %v401 = vld [vmem:[%s5 + $0x4] sm:$0xf]
          %v402 = vld [vmem:[%s5 + $0x8] sm:$0xf]
          %v403 = vld [vmem:[%s5 + $0xc] sm:$0xf]
          %v404 = vld [vmem:[%s5 + $0x10] sm:$0xf]
          %v405 = vld [vmem:[%s5 + $0x14] sm:$0xf]
          %v406 = vld [vmem:[%s5 + $0x18] sm:$0xf]
          %v407 = vld [vmem:[%s5 + $0x1c] sm:$0xf]
          %v408 = vld [vmem:[%s5 + $0x20] sm:$0xf]
          %v409 = vld [vmem:[%s5 + $0x24] sm:$0xf]
          %v410 = vld [vmem:[%s5 + $0x28] sm:$0xf]
          %v411 = vld [vmem:[%s5 + $0x2c] sm:$0xf]
          %v412 = vld [vmem:[%s5 + $0x30] sm:$0xf]
          %v413 = vld [vmem:[%s5 + $0x34] sm:$0xf]
          %v414 = vld [vmem:[%s5 + $0x38] sm:$0xf]
          %v415 = vld [vmem:[%s5 + $0x3c] sm:$0xf]
          %v416 = vld [vmem:[%s6] sm:$0x1]
          %v418 = vperm.slane %v416, 0
          %v436 = vunpack.c.l.b16 %v400
          %v437 = vunpack.c.l.b16 %v401
          %v438 = vunpack.c.l.b16 %v402
          %v439 = vunpack.c.l.b16 %v403
          %v440 = vunpack.c.l.b16 %v404
          %v441 = vunpack.c.l.b16 %v405
          %v442 = vunpack.c.l.b16 %v406
          %v443 = vunpack.c.l.b16 %v407
          %v444 = vunpack.c.l.b16 %v408
          %v445 = vunpack.c.l.b16 %v409
          %v446 = vunpack.c.l.b16 %v410
          %v447 = vunpack.c.l.b16 %v411
          %v448 = vunpack.c.l.b16 %v412
          %v449 = vunpack.c.l.b16 %v413
          %v450 = vunpack.c.l.b16 %v414
          %v451 = vunpack.c.l.b16 %v415
          %v452 = vpack.c.b16 %v437, %v436
          %v453 = vpack.c.b16 %v439, %v438
          %v454 = vpack.c.b16 %v441, %v440
          %v455 = vpack.c.b16 %v443, %v442
          %v456 = vpack.c.b16 %v445, %v444
          %v457 = vpack.c.b16 %v447, %v446
          %v458 = vpack.c.b16 %v449, %v448
          %v459 = vpack.c.b16 %v451, %v450
          %468 = vmatpush.bf16.msra.mxu0 %v459
          %469 = vmatpush.bf16.msra.mxu0 %v458
          %470 = vmatpush.bf16.msra.mxu0 %v457
          %471 = vmatpush.bf16.msra.mxu0 %v456
          %472 = vmatpush.bf16.msra.mxu0 %v455
          %473 = vmatpush.bf16.msra.mxu0 %v454
          %474 = vmatpush.bf16.msra.mxu0 %v453
          %475 = vmatpush.bf16.msra.mxu0 %v452
          %476 = vmatmul.bf16.gmra.mxu0 %v399
          %v477 = vpop.f32.mrf.mxu0
          %v478 = vadd.f32 %v418, %v477
          %v479 = vpop.f32.mrf.mxu0
          %480 = vdwg.mxu0
          %481 = vst [vmem:[#allocation2] sm:$0xf] %v478
        $region64: #{tpu_custom_call.1} parent=59 // pred_fallthru
          _
        %v482 = vld [vmem:[%s348] sm:$0xff]
        %v483 = vld [vmem:[%s348 + $0x8] sm:$0xff]
        %v484 = vld [vmem:[%s348 + $0x10] sm:$0xff]
        %v485 = vld [vmem:[%s348 + $0x18] sm:$0xff]
        %v486 = vld [vmem:[%s348 + $0x20] sm:$0xff]
        %v487 = vld [vmem:[%s348 + $0x28] sm:$0xff]
        %v488 = vld [vmem:[%s348 + $0x30] sm:$0xff]
        %v489 = vld [vmem:[%s348 + $0x38] sm:$0xff]
        %v490 = vld [vmem:[%s348 + $0x40] sm:$0xff]
        %v491 = vld [vmem:[%s348 + $0x48] sm:$0xff]
        %v492 = vld [vmem:[%s348 + $0x50] sm:$0xff]
        %v493 = vld [vmem:[%s348 + $0x58] sm:$0xff]
        %v494 = vld [vmem:[%s348 + $0x60] sm:$0xff]
        %v495 = vld [vmem:[%s348 + $0x68] sm:$0xff]
        %v496 = vld [vmem:[%s348 + $0x70] sm:$0xff]
        %v497 = vld [vmem:[%s348 + $0x78] sm:$0xff]
        %498 = vadd.xlane.f32.xlu0 %v482
        %v499 = vpop.xlane.xlu0 %498
        %500 = vadd.xlane.f32.xlu0 %v483
        %v501 = vpop.xlane.xlu0 %500
        %502 = vadd.xlane.f32.xlu0 %v484
        %v503 = vpop.xlane.xlu0 %502
        %504 = vadd.xlane.f32.xlu0 %v485
        %v505 = vpop.xlane.xlu0 %504
        %506 = vadd.xlane.f32.xlu0 %v486
        %v507 = vpop.xlane.xlu0 %506
        %508 = vadd.xlane.f32.xlu0 %v487
        %v509 = vpop.xlane.xlu0 %508
        %510 = vadd.xlane.f32.xlu0 %v488
        %v511 = vpop.xlane.xlu0 %510
        %512 = vadd.xlane.f32.xlu0 %v489
        %v513 = vpop.xlane.xlu0 %512
        %514 = vadd.xlane.f32.xlu0 %v490
        %v515 = vpop.xlane.xlu0 %514
        %516 = vadd.xlane.f32.xlu0 %v491
        %v517 = vpop.xlane.xlu0 %516
        %518 = vadd.xlane.f32.xlu0 %v492
        %v519 = vpop.xlane.xlu0 %518
        %520 = vadd.xlane.f32.xlu0 %v493
        %v521 = vpop.xlane.xlu0 %520
        %522 = vadd.xlane.f32.xlu0 %v494
        %v523 = vpop.xlane.xlu0 %522
        %524 = vadd.xlane.f32.xlu0 %v495
        %v525 = vpop.xlane.xlu0 %524
        %526 = vadd.xlane.f32.xlu0 %v496
        %v527 = vpop.xlane.xlu0 %526
        %528 = vadd.xlane.f32.xlu0 %v497
        %v529 = vpop.xlane.xlu0 %528
        %v530 = vrcp.pop 128.0
        %v531 = vmul.f32 128.0, %v530
        %v532 = vsub.f32 1.0, %v531
        %v533 = vmul.f32 %v530, %v532
        %v534 = vadd.f32 %v530, %v533
        %vm535 = vweird.f32 %v530
        %v536 = vsel %vm535, %v530, %v534
        %v537 = vmul.f32 %v499, %v536
        %v538 = vmul.f32 %v501, %v536
        %v539 = vmul.f32 %v503, %v536
        %v540 = vmul.f32 %v505, %v536
        %v541 = vmul.f32 %v507, %v536
        %v542 = vmul.f32 %v509, %v536
        %v543 = vmul.f32 %v511, %v536
        %v544 = vmul.f32 %v513, %v536
        %v545 = vmul.f32 %v515, %v536
        %v546 = vmul.f32 %v517, %v536
        %v547 = vmul.f32 %v519, %v536
        %v548 = vmul.f32 %v521, %v536
        %v549 = vmul.f32 %v523, %v536
        %v550 = vmul.f32 %v525, %v536
        %v551 = vmul.f32 %v527, %v536
        %v552 = vmul.f32 %v529, %v536
        %v553 = vsub.f32 %v482, %v537
        %v554 = vsub.f32 %v483, %v538
        %v555 = vsub.f32 %v484, %v539
        %v556 = vsub.f32 %v485, %v540
        %v557 = vsub.f32 %v486, %v541
        %v558 = vsub.f32 %v487, %v542
        %v559 = vsub.f32 %v488, %v543
        %v560 = vsub.f32 %v489, %v544
        %v561 = vsub.f32 %v490, %v545
        %v562 = vsub.f32 %v491, %v546
        %v563 = vsub.f32 %v492, %v547
        %v564 = vsub.f32 %v493, %v548
        %v565 = vsub.f32 %v494, %v549
        %v566 = vsub.f32 %v495, %v550
        %v567 = vsub.f32 %v496, %v551
        %v568 = vsub.f32 %v497, %v552
        %v569 = vmul.f32 %v553, %v553
        %v570 = vmul.f32 %v554, %v554
        %v571 = vmul.f32 %v555, %v555
        %v572 = vmul.f32 %v556, %v556
        %v573 = vmul.f32 %v557, %v557
        %v574 = vmul.f32 %v558, %v558
        %v575 = vmul.f32 %v559, %v559
        %v576 = vmul.f32 %v560, %v560
        %v577 = vmul.f32 %v561, %v561
        %v578 = vmul.f32 %v562, %v562
        %v579 = vmul.f32 %v563, %v563
        %v580 = vmul.f32 %v564, %v564
        %v581 = vmul.f32 %v565, %v565
        %v582 = vmul.f32 %v566, %v566
        %v583 = vmul.f32 %v567, %v567
        %v584 = vmul.f32 %v568, %v568
        %585 = vadd.xlane.f32.xlu0 %v569
        %v586 = vpop.xlane.xlu0 %585
        %587 = vadd.xlane.f32.xlu0 %v570
        %v588 = vpop.xlane.xlu0 %587
        %589 = vadd.xlane.f32.xlu0 %v571
        %v590 = vpop.xlane.xlu0 %589
        %591 = vadd.xlane.f32.xlu0 %v572
        %v592 = vpop.xlane.xlu0 %591
        %593 = vadd.xlane.f32.xlu0 %v573
        %v594 = vpop.xlane.xlu0 %593
        %595 = vadd.xlane.f32.xlu0 %v574
        %v596 = vpop.xlane.xlu0 %595
        %597 = vadd.xlane.f32.xlu0 %v575
        %v598 = vpop.xlane.xlu0 %597
        %599 = vadd.xlane.f32.xlu0 %v576
        %v600 = vpop.xlane.xlu0 %599
        %601 = vadd.xlane.f32.xlu0 %v577
        %v602 = vpop.xlane.xlu0 %601
        %603 = vadd.xlane.f32.xlu0 %v578
        %v604 = vpop.xlane.xlu0 %603
        %605 = vadd.xlane.f32.xlu0 %v579
        %v606 = vpop.xlane.xlu0 %605
        %607 = vadd.xlane.f32.xlu0 %v580
        %v608 = vpop.xlane.xlu0 %607
        %609 = vadd.xlane.f32.xlu0 %v581
        %v610 = vpop.xlane.xlu0 %609
        %611 = vadd.xlane.f32.xlu0 %v582
        %v612 = vpop.xlane.xlu0 %611
        %613 = vadd.xlane.f32.xlu0 %v583
        %v614 = vpop.xlane.xlu0 %613
        %615 = vadd.xlane.f32.xlu0 %v584
        %v616 = vpop.xlane.xlu0 %615
        %v617 = vmul.f32 %v586, %v536
        %v618 = vmul.f32 %v588, %v536
        %v619 = vmul.f32 %v590, %v536
        %v620 = vmul.f32 %v592, %v536
        %v621 = vmul.f32 %v594, %v536
        %v622 = vmul.f32 %v596, %v536
        %v623 = vmul.f32 %v598, %v536
        %v624 = vmul.f32 %v600, %v536
        %v625 = vmul.f32 %v602, %v536
        %v626 = vmul.f32 %v604, %v536
        %v627 = vmul.f32 %v606, %v536
        %v628 = vmul.f32 %v608, %v536
        %v629 = vmul.f32 %v610, %v536
        %v630 = vmul.f32 %v612, %v536
        %v631 = vmul.f32 %v614, %v536
        %v632 = vmul.f32 %v616, %v536
        %v633 = vadd.f32 %v617, 1e-05
        %v634 = vadd.f32 %v618, 1e-05
        %v635 = vadd.f32 %v619, 1e-05
        %v636 = vadd.f32 %v620, 1e-05
        %v637 = vadd.f32 %v621, 1e-05
        %v638 = vadd.f32 %v622, 1e-05
        %v639 = vadd.f32 %v623, 1e-05
        %v640 = vadd.f32 %v624, 1e-05
        %v641 = vadd.f32 %v625, 1e-05
        %v642 = vadd.f32 %v626, 1e-05
        %v643 = vadd.f32 %v627, 1e-05
        %v644 = vadd.f32 %v628, 1e-05
        %v645 = vadd.f32 %v629, 1e-05
        %v646 = vadd.f32 %v630, 1e-05
        %v647 = vadd.f32 %v631, 1e-05
        %v648 = vadd.f32 %v632, 1e-05
        %v649 = vrsqrt.pop %v633
        %v650 = vmul.f32 %v649, %v633
        %v651 = vmul.f32 %v650, %v649
        %v652 = vmul.f32 0.5, %v651
        %v653 = vsub.f32 1.5, %v652
        %v654 = vmul.f32 %v649, %v653
        %vm655 = vweird.f32 %v633
        %vm656 = vweird.f32 %v649
        %vm657 = vmor %vm655, %vm656
        %v658 = vsel %vm657, %v649, %v654
        %v659 = vrsqrt.pop %v634
        %v660 = vmul.f32 %v659, %v634
        %v661 = vmul.f32 %v660, %v659
        %v662 = vmul.f32 0.5, %v661
        %v663 = vsub.f32 1.5, %v662
        %v664 = vmul.f32 %v659, %v663
        %vm665 = vweird.f32 %v634
        %vm666 = vweird.f32 %v659
        %vm667 = vmor %vm665, %vm666
        %v668 = vsel %vm667, %v659, %v664
        %v669 = vrsqrt.pop %v635
        %v670 = vmul.f32 %v669, %v635
        %v671 = vmul.f32 %v670, %v669
        %v672 = vmul.f32 0.5, %v671
        %v673 = vsub.f32 1.5, %v672
        %v674 = vmul.f32 %v669, %v673
        %vm675 = vweird.f32 %v635
        %vm676 = vweird.f32 %v669
        %vm677 = vmor %vm675, %vm676
        %v678 = vsel %vm677, %v669, %v674
        %v679 = vrsqrt.pop %v636
        %v680 = vmul.f32 %v679, %v636
        %v681 = vmul.f32 %v680, %v679
        %v682 = vmul.f32 0.5, %v681
        %v683 = vsub.f32 1.5, %v682
        %v684 = vmul.f32 %v679, %v683
        %vm685 = vweird.f32 %v636
        %vm686 = vweird.f32 %v679
        %vm687 = vmor %vm685, %vm686
        %v688 = vsel %vm687, %v679, %v684
        %v689 = vrsqrt.pop %v637
        %v690 = vmul.f32 %v689, %v637
        %v691 = vmul.f32 %v690, %v689
        %v692 = vmul.f32 0.5, %v691
        %v693 = vsub.f32 1.5, %v692
        %v694 = vmul.f32 %v689, %v693
        %vm695 = vweird.f32 %v637
        %vm696 = vweird.f32 %v689
        %vm697 = vmor %vm695, %vm696
        %v698 = vsel %vm697, %v689, %v694
        %v699 = vrsqrt.pop %v638
        %v700 = vmul.f32 %v699, %v638
        %v701 = vmul.f32 %v700, %v699
        %v702 = vmul.f32 0.5, %v701
        %v703 = vsub.f32 1.5, %v702
        %v704 = vmul.f32 %v699, %v703
        %vm705 = vweird.f32 %v638
        %vm706 = vweird.f32 %v699
        %vm707 = vmor %vm705, %vm706
        %v708 = vsel %vm707, %v699, %v704
        %v709 = vrsqrt.pop %v639
        %v710 = vmul.f32 %v709, %v639
        %v711 = vmul.f32 %v710, %v709
        %v712 = vmul.f32 0.5, %v711
        %v713 = vsub.f32 1.5, %v712
        %v714 = vmul.f32 %v709, %v713
        %vm715 = vweird.f32 %v639
        %vm716 = vweird.f32 %v709
        %vm717 = vmor %vm715, %vm716
        %v718 = vsel %vm717, %v709, %v714
        %v719 = vrsqrt.pop %v640
        %v720 = vmul.f32 %v719, %v640
        %v721 = vmul.f32 %v720, %v719
        %v722 = vmul.f32 0.5, %v721
        %v723 = vsub.f32 1.5, %v722
        %v724 = vmul.f32 %v719, %v723
        %vm725 = vweird.f32 %v640
        %vm726 = vweird.f32 %v719
        %vm727 = vmor %vm725, %vm726
        %v728 = vsel %vm727, %v719, %v724
        %v729 = vrsqrt.pop %v641
        %v730 = vmul.f32 %v729, %v641
        %v731 = vmul.f32 %v730, %v729
        %v732 = vmul.f32 0.5, %v731
        %v733 = vsub.f32 1.5, %v732
        %v734 = vmul.f32 %v729, %v733
        %vm735 = vweird.f32 %v641
        %vm736 = vweird.f32 %v729
        %vm737 = vmor %vm735, %vm736
        %v738 = vsel %vm737, %v729, %v734
        %v739 = vrsqrt.pop %v642
        %v740 = vmul.f32 %v739, %v642
        %v741 = vmul.f32 %v740, %v739
        %v742 = vmul.f32 0.5, %v741
        %v743 = vsub.f32 1.5, %v742
        %v744 = vmul.f32 %v739, %v743
        %vm745 = vweird.f32 %v642
        %vm746 = vweird.f32 %v739
        %vm747 = vmor %vm745, %vm746
        %v748 = vsel %vm747, %v739, %v744
        %v749 = vrsqrt.pop %v643
        %v750 = vmul.f32 %v749, %v643
        %v751 = vmul.f32 %v750, %v749
        %v752 = vmul.f32 0.5, %v751
        %v753 = vsub.f32 1.5, %v752
        %v754 = vmul.f32 %v749, %v753
        %vm755 = vweird.f32 %v643
        %vm756 = vweird.f32 %v749
        %vm757 = vmor %vm755, %vm756
        %v758 = vsel %vm757, %v749, %v754
        %v759 = vrsqrt.pop %v644
        %v760 = vmul.f32 %v759, %v644
        %v761 = vmul.f32 %v760, %v759
        %v762 = vmul.f32 0.5, %v761
        %v763 = vsub.f32 1.5, %v762
        %v764 = vmul.f32 %v759, %v763
        %vm765 = vweird.f32 %v644
        %vm766 = vweird.f32 %v759
        %vm767 = vmor %vm765, %vm766
        %v768 = vsel %vm767, %v759, %v764
        %v769 = vrsqrt.pop %v645
        %v770 = vmul.f32 %v769, %v645
        %v771 = vmul.f32 %v770, %v769
        %v772 = vmul.f32 0.5, %v771
        %v773 = vsub.f32 1.5, %v772
        %v774 = vmul.f32 %v769, %v773
        %vm775 = vweird.f32 %v645
        %vm776 = vweird.f32 %v769
        %vm777 = vmor %vm775, %vm776
        %v778 = vsel %vm777, %v769, %v774
        %v779 = vrsqrt.pop %v646
        %v780 = vmul.f32 %v779, %v646
        %v781 = vmul.f32 %v780, %v779
        %v782 = vmul.f32 0.5, %v781
        %v783 = vsub.f32 1.5, %v782
        %v784 = vmul.f32 %v779, %v783
        %vm785 = vweird.f32 %v646
        %vm786 = vweird.f32 %v779
        %vm787 = vmor %vm785, %vm786
        %v788 = vsel %vm787, %v779, %v784
        %v789 = vrsqrt.pop %v647
        %v790 = vmul.f32 %v789, %v647
        %v791 = vmul.f32 %v790, %v789
        %v792 = vmul.f32 0.5, %v791
        %v793 = vsub.f32 1.5, %v792
        %v794 = vmul.f32 %v789, %v793
        %vm795 = vweird.f32 %v647
        %vm796 = vweird.f32 %v789
        %vm797 = vmor %vm795, %vm796
        %v798 = vsel %vm797, %v789, %v794
        %v799 = vrsqrt.pop %v648
        %v800 = vmul.f32 %v799, %v648
        %v801 = vmul.f32 %v800, %v799
        %v802 = vmul.f32 0.5, %v801
        %v803 = vsub.f32 1.5, %v802
        %v804 = vmul.f32 %v799, %v803
        %vm805 = vweird.f32 %v648
        %vm806 = vweird.f32 %v799
        %vm807 = vmor %vm805, %vm806
        %v808 = vsel %vm807, %v799, %v804
        %v809 = vmul.f32 %v553, %v658
        %v810 = vmul.f32 %v554, %v668
        %v811 = vmul.f32 %v555, %v678
        %v812 = vmul.f32 %v556, %v688
        %v813 = vmul.f32 %v557, %v698
        %v814 = vmul.f32 %v558, %v708
        %v815 = vmul.f32 %v559, %v718
        %v816 = vmul.f32 %v560, %v728
        %v817 = vmul.f32 %v561, %v738
        %v818 = vmul.f32 %v562, %v748
        %v819 = vmul.f32 %v563, %v758
        %v820 = vmul.f32 %v564, %v768
        %v821 = vmul.f32 %v565, %v778
        %v822 = vmul.f32 %v566, %v788
        %v823 = vmul.f32 %v567, %v798
        %v824 = vmul.f32 %v568, %v808
        %v826 = vperm.slane %v350, 0
        %v828 = vmul.f32 %v809, %v826
        %v829 = vmul.f32 %v810, %v826
        %v830 = vmul.f32 %v811, %v826
        %v831 = vmul.f32 %v812, %v826
        %v832 = vmul.f32 %v813, %v826
        %v833 = vmul.f32 %v814, %v826
        %v834 = vmul.f32 %v815, %v826
        %v835 = vmul.f32 %v816, %v826
        %v836 = vmul.f32 %v817, %v826
        %v837 = vmul.f32 %v818, %v826
        %v838 = vmul.f32 %v819, %v826
        %v839 = vmul.f32 %v820, %v826
        %v840 = vmul.f32 %v821, %v826
        %v841 = vmul.f32 %v822, %v826
        %v842 = vmul.f32 %v823, %v826
        %v843 = vmul.f32 %v824, %v826
        %v845 = vperm.slane %v351, 0
        %v847 = vadd.f32 %v828, %v845
        %v848 = vadd.f32 %v829, %v845
        %v849 = vadd.f32 %v830, %v845
        %v850 = vadd.f32 %v831, %v845
        %v851 = vadd.f32 %v832, %v845
        %v852 = vadd.f32 %v833, %v845
        %v853 = vadd.f32 %v834, %v845
        %v854 = vadd.f32 %v835, %v845
        %v855 = vadd.f32 %v836, %v845
        %v856 = vadd.f32 %v837, %v845
        %v857 = vadd.f32 %v838, %v845
        %v858 = vadd.f32 %v839, %v845
        %v859 = vadd.f32 %v840, %v845
        %v860 = vadd.f32 %v841, %v845
        %v861 = vadd.f32 %v842, %v845
        %v862 = vadd.f32 %v843, %v845
        %v863 = vpack.c.bf16 %v848, %v847
        %v864 = vpack.c.bf16 %v850, %v849
        %v865 = vpack.c.bf16 %v852, %v851
        %v866 = vpack.c.bf16 %v854, %v853
        %v867 = vpack.c.bf16 %v856, %v855
        %v868 = vpack.c.bf16 %v858, %v857
        %v869 = vpack.c.bf16 %v860, %v859
        %v870 = vpack.c.bf16 %v862, %v861
        %v871 = vld [vmem:[%s7] sm:$0xf]
        %v872 = vld [vmem:[%s7 + $0x4] sm:$0xf]
        %v873 = vld [vmem:[%s7 + $0x8] sm:$0xf]
        %v874 = vld [vmem:[%s7 + $0xc] sm:$0xf]
        %v875 = vld [vmem:[%s7 + $0x10] sm:$0xf]
        %v876 = vld [vmem:[%s7 + $0x14] sm:$0xf]
        %v877 = vld [vmem:[%s7 + $0x18] sm:$0xf]
        %v878 = vld [vmem:[%s7 + $0x1c] sm:$0xf]
        %v879 = vld [vmem:[%s7 + $0x20] sm:$0xf]
        %v880 = vld [vmem:[%s7 + $0x24] sm:$0xf]
        %v881 = vld [vmem:[%s7 + $0x28] sm:$0xf]
        %v882 = vld [vmem:[%s7 + $0x2c] sm:$0xf]
        %v883 = vld [vmem:[%s7 + $0x30] sm:$0xf]
        %v884 = vld [vmem:[%s7 + $0x34] sm:$0xf]
        %v885 = vld [vmem:[%s7 + $0x38] sm:$0xf]
        %v886 = vld [vmem:[%s7 + $0x3c] sm:$0xf]
        %v887 = vld [vmem:[%s8] sm:$0x1]
        %v889 = vperm.slane %v887, 0
        %v907 = vunpack.c.l.b16 %v871
        %v908 = vunpack.c.l.b16 %v872
        %v909 = vunpack.c.l.b16 %v873
        %v910 = vunpack.c.l.b16 %v874
        %v911 = vunpack.c.l.b16 %v875
        %v912 = vunpack.c.l.b16 %v876
        %v913 = vunpack.c.l.b16 %v877
        %v914 = vunpack.c.l.b16 %v878
        %v915 = vunpack.c.l.b16 %v879
        %v916 = vunpack.c.l.b16 %v880
        %v917 = vunpack.c.l.b16 %v881
        %v918 = vunpack.c.l.b16 %v882
        %v919 = vunpack.c.l.b16 %v883
        %v920 = vunpack.c.l.b16 %v884
        %v921 = vunpack.c.l.b16 %v885
        %v922 = vunpack.c.l.b16 %v886
        %v923 = vpack.c.b16 %v908, %v907
        %v924 = vpack.c.b16 %v910, %v909
        %v925 = vpack.c.b16 %v912, %v911
        %v926 = vpack.c.b16 %v914, %v913
        %v927 = vpack.c.b16 %v916, %v915
        %v928 = vpack.c.b16 %v918, %v917
        %v929 = vpack.c.b16 %v920, %v919
        %v930 = vpack.c.b16 %v922, %v921
        %939 = vmatpush.bf16.msra.mxu0 %v930
        %940 = vmatpush.bf16.msra.mxu0 %v929
        %941 = vmatpush.bf16.msra.mxu0 %v928
        %942 = vmatpush.bf16.msra.mxu0 %v927
        %943 = vmatpush.bf16.msra.mxu0 %v926
        %944 = vmatpush.bf16.msra.mxu0 %v925
        %945 = vmatpush.bf16.msra.mxu0 %v924
        %946 = vmatpush.bf16.msra.mxu0 %v923
        %947 = vmatmul.bf16.gmra.mxu0 %v863
        %v948 = vpop.f32.mrf.mxu0
        %v949 = vadd.f32 %v889, %v948
        %v950 = vpop.f32.mrf.mxu0
        %v951 = vadd.f32 %v889, %v950
        %952 = vmatmul.bf16.gmra.mxu0 %v864
        %v953 = vpop.f32.mrf.mxu0
        %v954 = vadd.f32 %v889, %v953
        %v955 = vpop.f32.mrf.mxu0
        %v956 = vadd.f32 %v889, %v955
        %957 = vmatmul.bf16.gmra.mxu0 %v865
        %v958 = vpop.f32.mrf.mxu0
        %v959 = vadd.f32 %v889, %v958
        %v960 = vpop.f32.mrf.mxu0
        %v961 = vadd.f32 %v889, %v960
        %962 = vmatmul.bf16.gmra.mxu0 %v866
        %v963 = vpop.f32.mrf.mxu0
        %v964 = vadd.f32 %v889, %v963
        %v965 = vpop.f32.mrf.mxu0
        %v966 = vadd.f32 %v889, %v965
        %967 = vmatmul.bf16.gmra.mxu0 %v867
        %v968 = vpop.f32.mrf.mxu0
        %v969 = vadd.f32 %v889, %v968
        %v970 = vpop.f32.mrf.mxu0
        %v971 = vadd.f32 %v889, %v970
        %972 = vmatmul.bf16.gmra.mxu0 %v868
        %v973 = vpop.f32.mrf.mxu0
        %v974 = vadd.f32 %v889, %v973
        %v975 = vpop.f32.mrf.mxu0
        %v976 = vadd.f32 %v889, %v975
        %977 = vmatmul.bf16.gmra.mxu0 %v869
        %v978 = vpop.f32.mrf.mxu0
        %v979 = vadd.f32 %v889, %v978
        %v980 = vpop.f32.mrf.mxu0
        %v981 = vadd.f32 %v889, %v980
        %982 = vmatmul.bf16.gmra.mxu0 %v870
        %v983 = vpop.f32.mrf.mxu0
        %v984 = vadd.f32 %v889, %v983
        %v985 = vpop.f32.mrf.mxu0
        %v986 = vadd.f32 %v889, %v985
        %987 = vdwg.mxu0
        %v988 = vld [vmem:[%s5] sm:$0xf]
        %v989 = vld [vmem:[%s5 + $0x4] sm:$0xf]
        %v990 = vld [vmem:[%s5 + $0x8] sm:$0xf]
        %v991 = vld [vmem:[%s5 + $0xc] sm:$0xf]
        %v992 = vld [vmem:[%s5 + $0x10] sm:$0xf]
        %v993 = vld [vmem:[%s5 + $0x14] sm:$0xf]
        %v994 = vld [vmem:[%s5 + $0x18] sm:$0xf]
        %v995 = vld [vmem:[%s5 + $0x1c] sm:$0xf]
        %v996 = vld [vmem:[%s5 + $0x20] sm:$0xf]
        %v997 = vld [vmem:[%s5 + $0x24] sm:$0xf]
        %v998 = vld [vmem:[%s5 + $0x28] sm:$0xf]
        %v999 = vld [vmem:[%s5 + $0x2c] sm:$0xf]
        %v1000 = vld [vmem:[%s5 + $0x30] sm:$0xf]
        %v1001 = vld [vmem:[%s5 + $0x34] sm:$0xf]
        %v1002 = vld [vmem:[%s5 + $0x38] sm:$0xf]
        %v1003 = vld [vmem:[%s5 + $0x3c] sm:$0xf]
        %v1004 = vld [vmem:[%s6] sm:$0x1]
        %v1006 = vperm.slane %v1004, 0
        %v1024 = vunpack.c.l.b16 %v988
        %v1025 = vunpack.c.l.b16 %v989
        %v1026 = vunpack.c.l.b16 %v990
        %v1027 = vunpack.c.l.b16 %v991
        %v1028 = vunpack.c.l.b16 %v992
        %v1029 = vunpack.c.l.b16 %v993
        %v1030 = vunpack.c.l.b16 %v994
        %v1031 = vunpack.c.l.b16 %v995
        %v1032 = vunpack.c.l.b16 %v996
        %v1033 = vunpack.c.l.b16 %v997
        %v1034 = vunpack.c.l.b16 %v998
        %v1035 = vunpack.c.l.b16 %v999
        %v1036 = vunpack.c.l.b16 %v1000
        %v1037 = vunpack.c.l.b16 %v1001
        %v1038 = vunpack.c.l.b16 %v1002
        %v1039 = vunpack.c.l.b16 %v1003
        %v1040 = vpack.c.b16 %v1025, %v1024
        %v1041 = vpack.c.b16 %v1027, %v1026
        %v1042 = vpack.c.b16 %v1029, %v1028
        %v1043 = vpack.c.b16 %v1031, %v1030
        %v1044 = vpack.c.b16 %v1033, %v1032
        %v1045 = vpack.c.b16 %v1035, %v1034
        %v1046 = vpack.c.b16 %v1037, %v1036
        %v1047 = vpack.c.b16 %v1039, %v1038
        %1056 = vmatpush.bf16.msra.mxu0 %v1047
        %1057 = vmatpush.bf16.msra.mxu0 %v1046
        %1058 = vmatpush.bf16.msra.mxu0 %v1045
        %1059 = vmatpush.bf16.msra.mxu0 %v1044
        %1060 = vmatpush.bf16.msra.mxu0 %v1043
        %1061 = vmatpush.bf16.msra.mxu0 %v1042
        %1062 = vmatpush.bf16.msra.mxu0 %v1041
        %1063 = vmatpush.bf16.msra.mxu0 %v1040
        %1064 = vmatmul.bf16.gmra.mxu0 %v863
        %v1065 = vpop.f32.mrf.mxu0
        %v1066 = vadd.f32 %v1006, %v1065
        %v1067 = vpop.f32.mrf.mxu0
        %v1068 = vadd.f32 %v1006, %v1067
        %1069 = vmatmul.bf16.gmra.mxu0 %v864
        %v1070 = vpop.f32.mrf.mxu0
        %v1071 = vadd.f32 %v1006, %v1070
        %v1072 = vpop.f32.mrf.mxu0
        %v1073 = vadd.f32 %v1006, %v1072
        %1074 = vmatmul.bf16.gmra.mxu0 %v865
        %v1075 = vpop.f32.mrf.mxu0
        %v1076 = vadd.f32 %v1006, %v1075
        %v1077 = vpop.f32.mrf.mxu0
        %v1078 = vadd.f32 %v1006, %v1077
        %1079 = vmatmul.bf16.gmra.mxu0 %v866
        %v1080 = vpop.f32.mrf.mxu0
        %v1081 = vadd.f32 %v1006, %v1080
        %v1082 = vpop.f32.mrf.mxu0
        %v1083 = vadd.f32 %v1006, %v1082
        %1084 = vmatmul.bf16.gmra.mxu0 %v867
        %v1085 = vpop.f32.mrf.mxu0
        %v1086 = vadd.f32 %v1006, %v1085
        %v1087 = vpop.f32.mrf.mxu0
        %v1088 = vadd.f32 %v1006, %v1087
        %1089 = vmatmul.bf16.gmra.mxu0 %v868
        %v1090 = vpop.f32.mrf.mxu0
        %v1091 = vadd.f32 %v1006, %v1090
        %v1092 = vpop.f32.mrf.mxu0
        %v1093 = vadd.f32 %v1006, %v1092
        %1094 = vmatmul.bf16.gmra.mxu0 %v869
        %v1095 = vpop.f32.mrf.mxu0
        %v1096 = vadd.f32 %v1006, %v1095
        %v1097 = vpop.f32.mrf.mxu0
        %v1098 = vadd.f32 %v1006, %v1097
        %1099 = vmatmul.bf16.gmra.mxu0 %v870
        %v1100 = vpop.f32.mrf.mxu0
        %v1101 = vadd.f32 %v1006, %v1100
        %v1102 = vpop.f32.mrf.mxu0
        %v1103 = vadd.f32 %v1006, %v1102
        %1104 = vdwg.mxu0
        %v1105 = vld [vmem:[#allocation2] sm:$0xf]
        %v1106 = vpack.c.bf16 %v1105, %v1105
        %v1107 = vpack.c.bf16 %v1068, %v1066
        %v1108 = vpack.c.bf16 %v1073, %v1071
        %v1109 = vpack.c.bf16 %v1078, %v1076
        %v1110 = vpack.c.bf16 %v1083, %v1081
        %v1111 = vpack.c.bf16 %v1088, %v1086
        %v1112 = vpack.c.bf16 %v1093, %v1091
        %v1113 = vpack.c.bf16 %v1098, %v1096
        %v1114 = vpack.c.bf16 %v1103, %v1101
        %1115 = vmatpush.bf16.xpose.msra.mxu0 %v1114
        %1116 = vmatpush.bf16.xpose.msra.mxu0 %v1113
        %1117 = vmatpush.bf16.xpose.msra.mxu0 %v1112
        %1118 = vmatpush.bf16.xpose.msra.mxu0 %v1111
        %1119 = vmatpush.bf16.xpose.msra.mxu0 %v1110
        %1120 = vmatpush.bf16.xpose.msra.mxu0 %v1109
        %1121 = vmatpush.bf16.xpose.msra.mxu0 %v1108
        %1122 = vmatpush.bf16.xpose.msra.mxu0 %v1107
        %1123 = vmatmul.bf16.gmra.mxu0 %v1106
        %v1124 = vpop.f32.mrf.mxu0
        %v1125 = vadd.f32 0.0, %v1124
        %v1126 = vpop.f32.mrf.mxu0
        %1127 = vdwg.mxu0
        %v1128 = vmul.f32 %v1125, 0.088388346
        %v1129 = vlaneseq
        %v1130 = vand.u32 %v1129, 127
        %s1131 = smul.u32 %s24, 128
        %v1132 = vstv %s1131
        %v1133 = vadd.s32 %v1130, %v1132
        %s1134 = sld [smem:[#allocation7]]
        %v1135 = vstv %s1134
        %vm1136 = vcmp.lt.s32.totalorder %v1133, %v1135
        %v1137 = vsel %vm1136, 1, 0
        %v1138 = vcvt.s32.f32 %v1137
        %v1139 = vld [vmem:[#allocation3] sm:$0xf]
        %vm1140 = vcmask 1043456
        %v1141 = vsel %vm1140, %v1128, -inf
        %1142 = vmax.xlane.f32.xlu0 %v1141
        %v1143 = vpop.xlane.xlu0 %1142
        %v1144 = vmax.f32 %v1139, %v1143
        %v1145 = vsub.f32 %v1139, %v1144
        %v1146 = vmul.f32 %v1145, 1.442695
        %v1147 = vpow.pop %v1146
        %1149 = vset.pattern.permute.xlu0 0
        %1150 = vperm.xlu0 %1149, %v1144
        %v1151 = vpop.permute.xlu0 %1150
        %v1153 = vsub.f32 %v1128, %v1151
        %v1154 = vmul.f32 %v1153, 1.442695
        %v1155 = vpow.pop %v1154
        %v1156 = vmul.f32 %v1155, %v1138
        %v1157 = vld [vmem:[#allocation4] sm:$0xf]
        %v1158 = vmul.f32 %v1147, %v1157
        %v1159 = vsel %vm1140, %v1156, 0.0
        %1160 = vadd.xlane.f32.xlu0 %v1159
        %v1161 = vpop.xlane.xlu0 %1160
        %v1162 = vadd.f32 %v1158, %v1161
        %vm1163 = vcmask 3072
        %1164 = vst.msk [vmem:[#allocation4] sm:$0xf] %vm1163, %v1162
        %v1165 = vld [vmem:[#allocation5] sm:$0xf]
        %1167 = vset.pattern.permute.xlu0 0
        %1168 = vperm.xlu0 %1167, %v1147
        %v1169 = vpop.permute.xlu0 %1168
        %v1171 = vmul.f32 %v1169, %v1165
        %v1172 = vpack.c.bf16 %v1156, %v1156
        %v1173 = vpack.c.bf16 %v951, %v949
        %v1174 = vpack.c.bf16 %v956, %v954
        %v1175 = vpack.c.bf16 %v961, %v959
        %v1176 = vpack.c.bf16 %v966, %v964
        %v1177 = vpack.c.bf16 %v971, %v969
        %v1178 = vpack.c.bf16 %v976, %v974
        %v1179 = vpack.c.bf16 %v981, %v979
        %v1180 = vpack.c.bf16 %v986, %v984
        %1181 = vmatpush.bf16.msra.mxu0 %v1180
        %1182 = vmatpush.bf16.msra.mxu0 %v1179
        %1183 = vmatpush.bf16.msra.mxu0 %v1178
        %1184 = vmatpush.bf16.msra.mxu0 %v1177
        %1185 = vmatpush.bf16.msra.mxu0 %v1176
        %1186 = vmatpush.bf16.msra.mxu0 %v1175
        %1187 = vmatpush.bf16.msra.mxu0 %v1174
        %1188 = vmatpush.bf16.msra.mxu0 %v1173
        %1189 = vmatmul.bf16.gmra.mxu0 %v1172
        %v1190 = vpop.f32.mrf.mxu0
        %v1191 = vadd.f32 0.0, %v1190
        %v1192 = vpop.f32.mrf.mxu0
        %1193 = vdwg.mxu0
        %v1194 = vadd.f32 %v1171, %v1191
        %1195 = vst [vmem:[#allocation5] sm:$0xf] %v1194
        %1196 = vst.msk [vmem:[#allocation3] sm:$0xf] %vm1163, %v1144
        %p1197 = scmp.eq.s32.totalorder %s24, 1
        // Predicated region
        $region65: #{tpu_custom_call.1} parent=59 // pred_check
          %p1198 = pneg %p1197
        $region66: #{tpu_custom_call.1} parent=59 // pred_check_branch
          %1200 = sbr.rel (%p1198) target = $region68
        $region67: #{tpu_custom_call.1} parent=59 // pred_region
          %v1201 = vld [vmem:[#allocation5] sm:$0xf]
          %v1202 = vld [vmem:[#allocation4] sm:$0xf]
          %v1203 = vrcp.pop %v1202
          %1205 = vset.pattern.permute.xlu0 0
          %1206 = vperm.xlu0 %1205, %v1203
          %v1207 = vpop.permute.xlu0 %1206
          %v1209 = vmul.f32 %v1201, %v1207
          %v1210 = vld [vmem:[%s10] sm:$0x1]
          %v1211 = vld [vmem:[%s9] sm:$0xff]
          %v1212 = vld [vmem:[%s9 + $0x8] sm:$0xff]
          %v1213 = vld [vmem:[%s9 + $0x10] sm:$0xff]
          %v1214 = vld [vmem:[%s9 + $0x18] sm:$0xff]
          %v1215 = vld [vmem:[%s9 + $0x20] sm:$0xff]
          %v1216 = vld [vmem:[%s9 + $0x28] sm:$0xff]
          %v1217 = vld [vmem:[%s9 + $0x30] sm:$0xff]
          %v1218 = vld [vmem:[%s9 + $0x38] sm:$0xff]
          %v1219 = vld [vmem:[%s9 + $0x40] sm:$0xff]
          %v1220 = vld [vmem:[%s9 + $0x48] sm:$0xff]
          %v1221 = vld [vmem:[%s9 + $0x50] sm:$0xff]
          %v1222 = vld [vmem:[%s9 + $0x58] sm:$0xff]
          %v1223 = vld [vmem:[%s9 + $0x60] sm:$0xff]
          %v1224 = vld [vmem:[%s9 + $0x68] sm:$0xff]
          %v1225 = vld [vmem:[%s9 + $0x70] sm:$0xff]
          %v1226 = vld [vmem:[%s9 + $0x78] sm:$0xff]
          %1227 = vmatpush.msra.mxu0 %v1226
          %1228 = vmatpush.msra.mxu0 %v1225
          %1229 = vmatpush.msra.mxu0 %v1224
          %1230 = vmatpush.msra.mxu0 %v1223
          %1231 = vmatpush.msra.mxu0 %v1222
          %1232 = vmatpush.msra.mxu0 %v1221
          %1233 = vmatpush.msra.mxu0 %v1220
          %1234 = vmatpush.msra.mxu0 %v1219
          %1235 = vmatpush.msra.mxu0 %v1218
          %1236 = vmatpush.msra.mxu0 %v1217
          %1237 = vmatpush.msra.mxu0 %v1216
          %1238 = vmatpush.msra.mxu0 %v1215
          %1239 = vmatpush.msra.mxu0 %v1214
          %1240 = vmatpush.msra.mxu0 %v1213
          %1241 = vmatpush.msra.mxu0 %v1212
          %1242 = vmatpush.msra.mxu0 %v1211
          %1243 = vmatmul.f32.gmra.mxu0 %v1209
          %v1244 = vpop.f32.mrf.mxu0
          %v1245 = vadd.f32 0.0, %v1244
          %1246 = vdwg.mxu0
          %v1247 = vadd.f32 %v1210, %v1245
          %v1248 = vld [vmem:[%s9 + $0x80] sm:$0xff]
          %v1249 = vld [vmem:[%s9 + $0x88] sm:$0xff]
          %v1250 = vld [vmem:[%s9 + $0x90] sm:$0xff]
          %v1251 = vld [vmem:[%s9 + $0x98] sm:$0xff]
          %v1252 = vld [vmem:[%s9 + $0xa0] sm:$0xff]
          %v1253 = vld [vmem:[%s9 + $0xa8] sm:$0xff]
          %v1254 = vld [vmem:[%s9 + $0xb0] sm:$0xff]
          %v1255 = vld [vmem:[%s9 + $0xb8] sm:$0xff]
          %v1256 = vld [vmem:[%s9 + $0xc0] sm:$0xff]
          %v1257 = vld [vmem:[%s9 + $0xc8] sm:$0xff]
          %v1258 = vld [vmem:[%s9 + $0xd0] sm:$0xff]
          %v1259 = vld [vmem:[%s9 + $0xd8] sm:$0xff]
          %v1260 = vld [vmem:[%s9 + $0xe0] sm:$0xff]
          %v1261 = vld [vmem:[%s9 + $0xe8] sm:$0xff]
          %v1262 = vld [vmem:[%s9 + $0xf0] sm:$0xff]
          %v1263 = vld [vmem:[%s9 + $0xf8] sm:$0xff]
          %v1265 = vrot.slane %v1209, 1
          %1267 = vmatpush.msra.mxu0 %v1263
          %1268 = vmatpush.msra.mxu0 %v1262
          %1269 = vmatpush.msra.mxu0 %v1261
          %1270 = vmatpush.msra.mxu0 %v1260
          %1271 = vmatpush.msra.mxu0 %v1259
          %1272 = vmatpush.msra.mxu0 %v1258
          %1273 = vmatpush.msra.mxu0 %v1257
          %1274 = vmatpush.msra.mxu0 %v1256
          %1275 = vmatpush.msra.mxu0 %v1255
          %1276 = vmatpush.msra.mxu0 %v1254
          %1277 = vmatpush.msra.mxu0 %v1253
          %1278 = vmatpush.msra.mxu0 %v1252
          %1279 = vmatpush.msra.mxu0 %v1251
          %1280 = vmatpush.msra.mxu0 %v1250
          %1281 = vmatpush.msra.mxu0 %v1249
          %1282 = vmatpush.msra.mxu0 %v1248
          %1283 = vmatmul.f32.gmra.mxu0 %v1265
          %v1284 = vpop.f32.mrf.mxu0
          %v1285 = vadd.f32 0.0, %v1284
          %1286 = vdwg.mxu0
          %v1287 = vadd.f32 %v1247, %v1285
          %v1288 = vld [vmem:[%s9 + $0x100] sm:$0xff]
          %v1289 = vld [vmem:[%s9 + $0x108] sm:$0xff]
          %v1290 = vld [vmem:[%s9 + $0x110] sm:$0xff]
          %v1291 = vld [vmem:[%s9 + $0x118] sm:$0xff]
          %v1292 = vld [vmem:[%s9 + $0x120] sm:$0xff]
          %v1293 = vld [vmem:[%s9 + $0x128] sm:$0xff]
          %v1294 = vld [vmem:[%s9 + $0x130] sm:$0xff]
          %v1295 = vld [vmem:[%s9 + $0x138] sm:$0xff]
          %v1296 = vld [vmem:[%s9 + $0x140] sm:$0xff]
          %v1297 = vld [vmem:[%s9 + $0x148] sm:$0xff]
          %v1298 = vld [vmem:[%s9 + $0x150] sm:$0xff]
          %v1299 = vld [vmem:[%s9 + $0x158] sm:$0xff]
          %v1300 = vld [vmem:[%s9 + $0x160] sm:$0xff]
          %v1301 = vld [vmem:[%s9 + $0x168] sm:$0xff]
          %v1302 = vld [vmem:[%s9 + $0x170] sm:$0xff]
          %v1303 = vld [vmem:[%s9 + $0x178] sm:$0xff]
          %v1304 = vrot.slane %v1209, 2
          %1306 = vmatpush.msra.mxu0 %v1303
          %1307 = vmatpush.msra.mxu0 %v1302
          %1308 = vmatpush.msra.mxu0 %v1301
          %1309 = vmatpush.msra.mxu0 %v1300
          %1310 = vmatpush.msra.mxu0 %v1299
          %1311 = vmatpush.msra.mxu0 %v1298
          %1312 = vmatpush.msra.mxu0 %v1297
          %1313 = vmatpush.msra.mxu0 %v1296
          %1314 = vmatpush.msra.mxu0 %v1295
          %1315 = vmatpush.msra.mxu0 %v1294
          %1316 = vmatpush.msra.mxu0 %v1293
          %1317 = vmatpush.msra.mxu0 %v1292
          %1318 = vmatpush.msra.mxu0 %v1291
          %1319 = vmatpush.msra.mxu0 %v1290
          %1320 = vmatpush.msra.mxu0 %v1289
          %1321 = vmatpush.msra.mxu0 %v1288
          %1322 = vmatmul.f32.gmra.mxu0 %v1304
          %v1323 = vpop.f32.mrf.mxu0
          %v1324 = vadd.f32 0.0, %v1323
          %1325 = vdwg.mxu0
          %v1326 = vadd.f32 %v1287, %v1324
          %v1327 = vld [vmem:[%s9 + $0x180] sm:$0xff]
          %v1328 = vld [vmem:[%s9 + $0x188] sm:$0xff]
          %v1329 = vld [vmem:[%s9 + $0x190] sm:$0xff]
          %v1330 = vld [vmem:[%s9 + $0x198] sm:$0xff]
          %v1331 = vld [vmem:[%s9 + $0x1a0] sm:$0xff]
          %v1332 = vld [vmem:[%s9 + $0x1a8] sm:$0xff]
          %v1333 = vld [vmem:[%s9 + $0x1b0] sm:$0xff]
          %v1334 = vld [vmem:[%s9 + $0x1b8] sm:$0xff]
          %v1335 = vld [vmem:[%s9 + $0x1c0] sm:$0xff]
          %v1336 = vld [vmem:[%s9 + $0x1c8] sm:$0xff]
          %v1337 = vld [vmem:[%s9 + $0x1d0] sm:$0xff]
          %v1338 = vld [vmem:[%s9 + $0x1d8] sm:$0xff]
          %v1339 = vld [vmem:[%s9 + $0x1e0] sm:$0xff]
          %v1340 = vld [vmem:[%s9 + $0x1e8] sm:$0xff]
          %v1341 = vld [vmem:[%s9 + $0x1f0] sm:$0xff]
          %v1342 = vld [vmem:[%s9 + $0x1f8] sm:$0xff]
          %v1343 = vrot.slane %v1209, 3
          %1345 = vmatpush.msra.mxu0 %v1342
          %1346 = vmatpush.msra.mxu0 %v1341
          %1347 = vmatpush.msra.mxu0 %v1340
          %1348 = vmatpush.msra.mxu0 %v1339
          %1349 = vmatpush.msra.mxu0 %v1338
          %1350 = vmatpush.msra.mxu0 %v1337
          %1351 = vmatpush.msra.mxu0 %v1336
          %1352 = vmatpush.msra.mxu0 %v1335
          %1353 = vmatpush.msra.mxu0 %v1334
          %1354 = vmatpush.msra.mxu0 %v1333
          %1355 = vmatpush.msra.mxu0 %v1332
          %1356 = vmatpush.msra.mxu0 %v1331
          %1357 = vmatpush.msra.mxu0 %v1330
          %1358 = vmatpush.msra.mxu0 %v1329
          %1359 = vmatpush.msra.mxu0 %v1328
          %1360 = vmatpush.msra.mxu0 %v1327
          %1361 = vmatmul.f32.gmra.mxu0 %v1343
          %v1362 = vpop.f32.mrf.mxu0
          %v1363 = vadd.f32 0.0, %v1362
          %1364 = vdwg.mxu0
          %v1365 = vadd.f32 %v1326, %v1363
          %vm1366 = vcmask 24576
          %1367 = vst.msk [vmem:[#allocation8] sm:$0x1] %vm1366, %v1365
        $region68: #{tpu_custom_call.1} parent=59 // pred_fallthru
          _
        // Predicated region
        $region69: #{tpu_custom_call.1} parent=59 // pred_check
          %p1368 = pneg %p252
        $region70: #{tpu_custom_call.1} parent=59 // pred_check_branch
          %1370 = sbr.rel (%p1368) target = $region72
        $region71: #{tpu_custom_call.1} parent=59 // pred_region
          %1372 = vsyncadd [#allocation9], 0
          %s1374 = sshll.u32 [#allocation8], 4
          %s1375 = int_to_ptr.vmem [resolvable:$true] %s1374
          %s1376 = sshll.u32 %s11, 4
          %s1377 = int_to_ptr.hbm [resolvable:$true] %s1376
          %1379 = dma.vmem_to_hbm [thread:$0]  %s1375, 16, %s1377, [#allocation9]
        $region72: #{tpu_custom_call.1} parent=59 // pred_fallthru
          _
        // Predicated region
        $region73: #{tpu_custom_call.1} parent=59 // pred_check
          %p1380 = pneg %p252
        $region74: #{tpu_custom_call.1} parent=59 // pred_check_branch
          %1382 = sbr.rel (%p1380) target = $region76
        $region75: #{tpu_custom_call.1} parent=59 // pred_region
          %1384 = dma.done [#allocation9], 16
        $region76: #{tpu_custom_call.1} parent=59 // pred_fallthru
          _
      $region60: #{tpu_custom_call.1} parent=5 // pred_fallthru
        _
      %p1385 = scmp.le.s32.totalorder 2, %s19
      // Predicated region
      $region77: #{tpu_custom_call.1} parent=5 // pred_check
        %p1386 = pneg %p1385
      $region78: #{tpu_custom_call.1} parent=5 // pred_check_branch
        %1388 = sbr.rel (%p1386) target = $region80
      $region79: #{tpu_custom_call.1} parent=5 // pred_region
        %s1389 = ssub.s32 %s19, 2
      $region80: #{tpu_custom_call.1} parent=5 // pred_fallthru
        _
    $region6: #{tpu_custom_call.1} parent=1 // loop_footer
      %s23 = sadd.s32 1, %s19
    $region7: #{tpu_custom_call.1} parent=1 // loop_footer_branch
      %18 = sbr.rel target = $region3
    $region8: #{tpu_custom_call.1} parent=1 // loop_exit
      _
    %1390 = vsyncpa [#allocation9], 1
    %s1391 = scalar_lea.sflag [#allocation9], 1
    %1392 = vsyncpa %s1391, 1

</llo_original>
